<compile_context>
chip_gen: v7x
topology: tpu7x:2x2x1
jax: 0.10.0
libtpu: 0.0.40
codegen_flags: <defaults>
</compile_context>

<pallas_src>
import functools

import jax
import jax.numpy as jnp
from jax import lax
from jax.experimental import pallas as pl
from jax.experimental.pallas import tpu as pltpu

# ----------------------------- hyper-parameters -----------------------------
B = 2
C_IN, H_IMG, W_IMG = 4, 16, 16
D_IN = C_IN * H_IMG * W_IMG        # 1024 flattened input dim
HID = 256                          # netF hidden dim
FEAT_DIM = 128                     # output_dim (feature dimension)
NUM_CLASSES = 16
C_PAD = 128                        # netC columns zero-padded to lane width
K_BUF = 256                        # memory bank size (K)
L_PAD = ((1 + K_BUF + 127) // 128) * 128   # lane-dense width of logits_ins (384)
M_MOM = 0.999                      # moco momentum
T_MOCO = 0.07                      # softmax temperature
TD = 256                           # D_IN block size (grid axis) -> 4 steps


def _bf16(v):
    return v.astype(jnp.bfloat16)


def _l2_normalize(v):
    # F.normalize(v, dim=1) == v / max(||v||, 1e-12), via rsqrt (EUP slot).
    ss = jnp.sum(v * v, axis=-1, keepdims=True)
    return v * lax.rsqrt(jnp.maximum(ss, 1e-24))


# ------------------------------- fused kernel --------------------------------
def fused_adamoco_kernel(
    # inputs
    xq_ref, xk_ref,
    w1q_ref, b1q_ref, w2q_ref, b2q_ref, wcq_ref, bcq_ref,
    w1k_ref, b1k_ref, w2k_ref, b2k_ref, wck_ref, bck_ref,
    memx_ref,                       # persistent padded bf16 bank: (FEAT_DIM, L_PAD)
    # outputs
    feats_q_ref, logits_q_ref, logits_ins_ref, k_ref,
    w1k_o_ref, b1k_o_ref, w2k_o_ref, b2k_o_ref, wck_o_ref, bck_o_ref,
    # scratch (persist across the D_IN grid axis)
    hq_acc, hk_acc,
    *, m, inv_t):
    f32 = jnp.float32
    i = pl.program_id(0)
    nsteps = pl.num_programs(0)

    # ---- per-block momentum update of w1 (hoisted single loads; VPU work is
    #      hidden under the double-buffered w1 DMA + MXU accumulation) --------
    w1q = w1q_ref[...]                                   # (TD, HID) f32, loaded once
    w1k_new = w1k_ref[...] * m + w1q * (1.0 - m)
    w1k_o_ref[...] = w1k_new                             # aliased with w1k input

    # ---- accumulate partial hidden activations for both branches ------------
    @pl.when(i == 0)
    def _():
        hq_acc[...] = jnp.zeros_like(hq_acc)
        hk_acc[...] = jnp.zeros_like(hk_acc)

    # x blocks arrive in bf16; weights cast once to bf16 for the MXU, f32 acc.
    hq_acc[...] += jnp.dot(xq_ref[...], _bf16(w1q), preferred_element_type=f32)
    hk_acc[...] += jnp.dot(xk_ref[...], _bf16(w1k_new), preferred_element_type=f32)

    # ---- tail: small momentum updates, second/third layers, normalize,
    #      instance logits — only on the last D_IN block ----------------------
    @pl.when(i == nsteps - 1)
    def _():
        b1q = b1q_ref[...]
        w2q = w2q_ref[...]
        b2q = b2q_ref[...]
        wcq = wcq_ref[...]
        bcq = bcq_ref[...]

        # momentum update of the remaining (small) key-encoder params
        b1k = b1k_ref[...] * m + b1q * (1.0 - m)
        w2k = w2k_ref[...] * m + w2q * (1.0 - m)
        b2k = b2k_ref[...] * m + b2q * (1.0 - m)
        wck = wck_ref[...] * m + wcq * (1.0 - m)
        bck = bck_ref[...] * m + bcq * (1.0 - m)
        b1k_o_ref[...] = b1k
        w2k_o_ref[...] = w2k
        b2k_o_ref[...] = b2k
        wck_o_ref[...] = wck
        bck_o_ref[...] = bck

        # query branch: feats_q = netB(netF(x_q)), logits_q = netC(feats_q)
        hq = jnp.maximum(hq_acc[...] + b1q, 0.0)
        feats_q = jnp.dot(_bf16(hq), _bf16(w2q),
                          preferred_element_type=f32) + b2q
        feats_q_ref[...] = feats_q
        logits_q_ref[...] = jnp.dot(_bf16(feats_q), _bf16(wcq),
                                    preferred_element_type=f32) + bcq
        q = _l2_normalize(feats_q)

        # key branch with the freshly updated key-encoder params
        hk = jnp.maximum(hk_acc[...] + b1k, 0.0)
        feats_k = jnp.dot(_bf16(hk), _bf16(w2k),
                          preferred_element_type=f32) + b2k
        k = _l2_normalize(feats_k)
        k_ref[...] = k

        # instance logits as one lane-dense (B, L_PAD) slab.  The bank's dummy
        # column 0 is overwritten with l_pos via an iota mask (no concat); the
        # zero tail columns (> K) are sliced off in the wrapper.
        l_all = jnp.dot(_bf16(q), memx_ref[...], preferred_element_type=f32)
        l_pos = jnp.sum(q * k, axis=-1, keepdims=True)
        lane = lax.broadcasted_iota(jnp.int32, l_all.shape, 1)
        logits_ins_ref[...] = jnp.where(
            lane == 0, jnp.broadcast_to(l_pos, l_all.shape), l_all) * inv_t


# --------------------------------- wrapper -----------------------------------
def _resident(shape):
    # full-array block, constant block index => fetched once, stays in VMEM
    return pl.BlockSpec(shape, lambda i: (0, 0))


@jax.jit
def adamoco_forward(im_q, im_k, params_q, params_k, mem_ext):
    """AdaMoCo.forward (non-'image' branch, cls_only=False).

    mem_ext is the persistent, padded, bf16 memory bank of shape
    (FEAT_DIM, L_PAD): column 0 is a dummy (l_pos slot), columns 1..K hold the
    normalized bank, the remaining columns are zero lane-padding.

    Returns (feats_q, logits_q, logits_ins, k, params_k_updated).
    """
    x_q = im_q.reshape(im_q.shape[0], -1).astype(jnp.bfloat16)
    x_k = im_k.reshape(im_k.shape[0], -1).astype(jnp.bfloat16)
    Bsz, Din = x_q.shape
    w1q, b1q, w2q, b2q, wcq, bcq = params_q
    w1k, b1k, w2k, b2k, wck, bck = params_k
    D = w2q.shape[1]
    Cp = wcq.shape[1]
    Lp = mem_ext.shape[1]
    nsteps = Din // TD

    x_spec = pl.BlockSpec((Bsz, TD), lambda i: (0, i))
    w1_spec = pl.BlockSpec((TD, HID), lambda i: (i, 0))

    inputs = (x_q, x_k,
              w1q, b1q, w2q, b2q, wcq, bcq,
              w1k, b1k, w2k, b2k, wck, bck,
              mem_ext)
    in_specs = [
        x_spec, x_spec,
        w1_spec, _resident(b1q.shape), _resident(w2q.shape),
        _resident(b2q.shape), _resident(wcq.shape), _resident(bcq.shape),
        w1_spec, _resident(b1k.shape), _resident(w2k.shape),
        _resident(b2k.shape), _resident(wck.shape), _resident(bck.shape),
        _resident(mem_ext.shape),
    ]
    out_shape = (
        jax.ShapeDtypeStruct((Bsz, D), jnp.float32),       # feats_q
        jax.ShapeDtypeStruct((Bsz, Cp), jnp.float32),      # logits_q (padded classes)
        jax.ShapeDtypeStruct((Bsz, Lp), jnp.float32),      # logits_ins (lane-dense)
        jax.ShapeDtypeStruct((Bsz, D), jnp.float32),       # k
        jax.ShapeDtypeStruct(w1k.shape, w1k.dtype),        # updated key params
        jax.ShapeDtypeStruct(b1k.shape, b1k.dtype),
        jax.ShapeDtypeStruct(w2k.shape, w2k.dtype),
        jax.ShapeDtypeStruct(b2k.shape, b2k.dtype),
        jax.ShapeDtypeStruct(wck.shape, wck.dtype),
        jax.ShapeDtypeStruct(bck.shape, bck.dtype),
    )
    out_specs = (
        _resident((Bsz, D)), _resident((Bsz, Cp)), _resident((Bsz, Lp)),
        _resident((Bsz, D)),
        w1_spec, _resident(b1k.shape), _resident(w2k.shape),
        _resident(b2k.shape), _resident(wck.shape), _resident(bck.shape),
    )

    outs = pl.pallas_call(
        functools.partial(fused_adamoco_kernel, m=M_MOM, inv_t=1.0 / T_MOCO),
        out_shape=out_shape,
        grid=(nsteps,),
        in_specs=in_specs,
        out_specs=out_specs,
        scratch_shapes=[pltpu.VMEM((Bsz, HID), jnp.float32),   # hq partial sums
                        pltpu.VMEM((Bsz, HID), jnp.float32)],  # hk partial sums
        # In-place momentum update: key params alias their updated outputs.
        # (A training loop would additionally jit with donate_argnums=(3,).)
        input_output_aliases={8: 4, 9: 5, 10: 6, 11: 7, 12: 8, 13: 9},
        compiler_params=pltpu.CompilerParams(
            dimension_semantics=("arbitrary",),
            vmem_limit_bytes=32 * 1024 * 1024),
    )(*inputs)

    feats_q, logits_q_pad, logits_ins_pad, k_norm = outs[:4]
    params_k_new = tuple(outs[4:])
    logits_q = logits_q_pad[:, :NUM_CLASSES]          # drop netC lane padding
    logits_ins = logits_ins_pad[:, :1 + K_BUF]        # drop bank lane padding
    return feats_q, logits_q, logits_ins, k_norm, params_k_new


# ------------------------------- references ----------------------------------
def _tree_momentum(params_q, params_k):
    return jax.tree_util.tree_map(
        lambda pq, pk: pk * M_MOM + pq * (1.0 - M_MOM), params_q, params_k)


def _encoder_mixed(x, params):
    """Mirrors kernel numerics: bf16 MXU operands, f32 accumulation."""
    w1, b1, w2, b2, wc, bc = params
    bf = jnp.bfloat16
    h = jnp.maximum(jnp.dot(x.astype(bf), w1.astype(bf),
                            preferred_element_type=jnp.float32) + b1, 0.0)
    feats = jnp.dot(h.astype(bf), w2.astype(bf),
                    preferred_element_type=jnp.float32) + b2
    logits = jnp.dot(feats.astype(bf), wc.astype(bf),
                     preferred_element_type=jnp.float32) + bc
    nrm = feats * jax.lax.rsqrt(
        jnp.maximum(jnp.sum(feats * feats, axis=-1, keepdims=True), 1e-24))
    return feats, logits, nrm


def _ref_forward_mixed(im_q, im_k, params_q, params_k, mem_feat):
    params_k_new = _tree_momentum(params_q, params_k)
    x_q = im_q.reshape(im_q.shape[0], -1)
    x_k = im_k.reshape(im_k.shape[0], -1)
    feats_q, logits_q, q = _encoder_mixed(x_q, params_q)
    _, _, k = _encoder_mixed(x_k, params_k_new)
    l_pos = jnp.sum(q * k, axis=-1, keepdims=True)
    l_neg = jnp.dot(q.astype(jnp.bfloat16), mem_feat.astype(jnp.bfloat16),
                    preferred_element_type=jnp.float32)
    logits_ins = jnp.concatenate([l_pos, l_neg], axis=1) / T_MOCO
    return feats_q, logits_q[:, :NUM_CLASSES], logits_ins, k, params_k_new


def _encoder_f32(x, params):
    w1, b1, w2, b2, wc, bc = params
    hp = jax.lax.Precision.HIGHEST
    h = jnp.maximum(jnp.dot(x, w1, precision=hp) + b1, 0.0)
    feats = jnp.dot(h, w2, precision=hp) + b2
    logits = jnp.dot(feats, wc, precision=hp) + bc
    nrm = jnp.sqrt(jnp.sum(feats * feats, axis=-1, keepdims=True))
    return feats, logits, feats / jnp.maximum(nrm, 1e-12)


def _ref_forward_f32(im_q, im_k, params_q, params_k, mem_feat):
    params_k_new = _tree_momentum(params_q, params_k)
    x_q = im_q.reshape(im_q.shape[0], -1)
    x_k = im_k.reshape(im_k.shape[0], -1)
    feats_q, logits_q, q = _encoder_f32(x_q, params_q)
    _, _, k = _encoder_f32(x_k, params_k_new)
    l_pos = jnp.sum(q * k, axis=-1, keepdims=True)
    l_neg = jnp.dot(q, mem_feat, precision=jax.lax.Precision.HIGHEST)
    logits_ins = jnp.concatenate([l_pos, l_neg], axis=1) / T_MOCO
    return feats_q, logits_q[:, :NUM_CLASSES], logits_ins, k, params_k_new


# ----------------------------------- main -------------------------------------
if __name__ == "__main__":
    key = jax.random.PRNGKey(0)
    ks = jax.random.split(key, 8)

    im_q = jax.random.normal(ks[0], (B, C_IN, H_IMG, W_IMG), jnp.float32)
    im_k = jax.random.normal(ks[1], (B, C_IN, H_IMG, W_IMG), jnp.float32)

    # synthetic encoder parameters (biases kept 2D [1, n]); netC stored with its
    # class dim zero-padded to 128 lanes so the logits output is lane-dense.
    w1 = jax.random.normal(ks[2], (D_IN, HID), jnp.float32) * 0.02
    b1 = jax.random.normal(ks[6], (1, HID), jnp.float32) * 0.01
    w2 = jax.random.normal(ks[3], (HID, FEAT_DIM), jnp.float32) * 0.02
    b2 = jax.random.normal(ks[7], (1, FEAT_DIM), jnp.float32) * 0.01
    wc = jnp.zeros((FEAT_DIM, C_PAD), jnp.float32).at[:, :NUM_CLASSES].set(
        jax.random.normal(ks[4], (FEAT_DIM, NUM_CLASSES), jnp.float32) * 0.02)
    bc = jnp.zeros((1, C_PAD), jnp.float32)
    params_q = (w1, b1, w2, b2, wc, bc)
    # momentum_model: slightly perturbed copy so the momentum update is exercised
    params_k = jax.tree_util.tree_map(lambda p: p * 0.95, params_q)

    # memory bank: randn(feature_dim, K), normalized along dim=0
    mem_feat = jax.random.normal(ks[5], (FEAT_DIM, K_BUF), jnp.float32)
    mem_feat = mem_feat / jnp.maximum(
        jnp.sqrt(jnp.sum(mem_feat * mem_feat, axis=0, keepdims=True)), 1e-12)
    # Persistent padded, lane-dense, bf16 bank layout (built ONCE, not per call):
    # col 0 = dummy (l_pos slot), cols 1..K = bank, cols K+1.. = zero lane pad.
    mem_ext = jnp.zeros((FEAT_DIM, L_PAD), jnp.bfloat16).at[:, 1:1 + K_BUF].set(
        mem_feat.astype(jnp.bfloat16))

    feats_q, logits_q, logits_ins, k, params_k_new = adamoco_forward(
        im_q, im_k, params_q, params_k, mem_ext)
    jax.block_until_ready((feats_q, logits_q, logits_ins, k, params_k_new))

    # tight check vs a JAX reference with identical (bf16-matmul) numerics
    r = _ref_forward_mixed(im_q, im_k, params_q, params_k, mem_feat)
    assert jnp.allclose(feats_q, r[0], atol=5e-3, rtol=5e-3)
    assert jnp.allclose(logits_q, r[1], atol=5e-3, rtol=5e-3)
    assert jnp.allclose(logits_ins, r[2], atol=5e-3, rtol=5e-3)
    assert jnp.allclose(k, r[3], atol=5e-3, rtol=5e-3)
    for a, b in zip(params_k_new, r[4]):
        assert jnp.allclose(a, b, atol=1e-6, rtol=1e-6)

    # loose semantic check vs a pure-f32 reference (bf16 MXU operands drift;
    # logits_ins is amplified by 1/T so it gets the loosest tolerance)
    rf = _ref_forward_f32(im_q, im_k, params_q, params_k, mem_feat)
    assert jnp.allclose(feats_q, rf[0], atol=5e-2, rtol=5e-2)
    assert jnp.allclose(logits_q, rf[1], atol=5e-2, rtol=5e-2)
    assert jnp.allclose(logits_ins, rf[2], atol=1e-1, rtol=5e-2)
    assert jnp.allclose(k, rf[3], atol=5e-2, rtol=5e-2)

    assert feats_q.shape == (B, FEAT_DIM)
    assert logits_q.shape == (B, NUM_CLASSES)
    assert logits_ins.shape == (B, 1 + K_BUF)
    assert k.shape == (B, FEAT_DIM)

    print("KERNEL_OK")
</pallas_src>

<mosaic_0001>
module attributes {stable_mosaic.version = 11 : i64} {
  func.func @fused_adamoco_kernel(%arg0: i32, %arg1: memref<2x256xbf16, #tpu.memory_space<vmem>>, %arg2: memref<2x256xbf16, #tpu.memory_space<vmem>>, %arg3: memref<256x256xf32, #tpu.memory_space<vmem>>, %arg4: memref<1x256xf32, #tpu.memory_space<vmem>>, %arg5: memref<256x128xf32, #tpu.memory_space<vmem>>, %arg6: memref<1x128xf32, #tpu.memory_space<vmem>>, %arg7: memref<128x128xf32, #tpu.memory_space<vmem>>, %arg8: memref<1x128xf32, #tpu.memory_space<vmem>>, %arg9: memref<256x256xf32, #tpu.memory_space<vmem>>, %arg10: memref<1x256xf32, #tpu.memory_space<vmem>>, %arg11: memref<256x128xf32, #tpu.memory_space<vmem>>, %arg12: memref<1x128xf32, #tpu.memory_space<vmem>>, %arg13: memref<128x128xf32, #tpu.memory_space<vmem>>, %arg14: memref<1x128xf32, #tpu.memory_space<vmem>>, %arg15: memref<128x384xbf16, #tpu.memory_space<vmem>>, %arg16: memref<2x128xf32, #tpu.memory_space<vmem>>, %arg17: memref<2x128xf32, #tpu.memory_space<vmem>>, %arg18: memref<2x384xf32, #tpu.memory_space<vmem>>, %arg19: memref<2x128xf32, #tpu.memory_space<vmem>>, %arg20: memref<256x256xf32, #tpu.memory_space<vmem>>, %arg21: memref<1x256xf32, #tpu.memory_space<vmem>>, %arg22: memref<256x128xf32, #tpu.memory_space<vmem>>, %arg23: memref<1x128xf32, #tpu.memory_space<vmem>>, %arg24: memref<128x128xf32, #tpu.memory_space<vmem>>, %arg25: memref<1x128xf32, #tpu.memory_space<vmem>>, %arg26: memref<2x256xf32, #tpu.memory_space<vmem>>, %arg27: memref<2x256xf32, #tpu.memory_space<vmem>>) attributes {dimension_semantics = [#tpu.dimension_semantics<arbitrary>], iteration_bounds = array<i64: 4>, scalar_prefetch = 0 : i64, scratch_operands = 2 : i64, tpu.core_type = #tpu.core_type<tc>, window_params = [{transform_indices = @transform_0, window_bounds = array<i64: 2, 256>}, {transform_indices = @transform_1, window_bounds = array<i64: 2, 256>}, {transform_indices = @transform_2, window_bounds = array<i64: 256, 256>}, {pipeline_mode = #tpu.pipeline_mode<synchronous>, transform_indices = @transform_3, window_bounds = array<i64: 1, 256>}, {pipeline_mode = #tpu.pipeline_mode<synchronous>, transform_indices = @transform_4, window_bounds = array<i64: 256, 128>}, {pipeline_mode = #tpu.pipeline_mode<synchronous>, transform_indices = @transform_5, window_bounds = array<i64: 1, 128>}, {pipeline_mode = #tpu.pipeline_mode<synchronous>, transform_indices = @transform_6, window_bounds = array<i64: 128, 128>}, {pipeline_mode = #tpu.pipeline_mode<synchronous>, transform_indices = @transform_7, window_bounds = array<i64: 1, 128>}, {transform_indices = @transform_8, window_bounds = array<i64: 256, 256>}, {pipeline_mode = #tpu.pipeline_mode<synchronous>, transform_indices = @transform_9, window_bounds = array<i64: 1, 256>}, {pipeline_mode = #tpu.pipeline_mode<synchronous>, transform_indices = @transform_10, window_bounds = array<i64: 256, 128>}, {pipeline_mode = #tpu.pipeline_mode<synchronous>, transform_indices = @transform_11, window_bounds = array<i64: 1, 128>}, {pipeline_mode = #tpu.pipeline_mode<synchronous>, transform_indices = @transform_12, window_bounds = array<i64: 128, 128>}, {pipeline_mode = #tpu.pipeline_mode<synchronous>, transform_indices = @transform_13, window_bounds = array<i64: 1, 128>}, {pipeline_mode = #tpu.pipeline_mode<synchronous>, transform_indices = @transform_14, window_bounds = array<i64: 128, 384>}, {pipeline_mode = #tpu.pipeline_mode<synchronous>, transform_indices = @transform_15, window_bounds = array<i64: 2, 128>}, {pipeline_mode = #tpu.pipeline_mode<synchronous>, transform_indices = @transform_16, window_bounds = array<i64: 2, 128>}, {pipeline_mode = #tpu.pipeline_mode<synchronous>, transform_indices = @transform_17, window_bounds = array<i64: 2, 384>}, {pipeline_mode = #tpu.pipeline_mode<synchronous>, transform_indices = @transform_18, window_bounds = array<i64: 2, 128>}, {transform_indices = @transform_19, window_bounds = array<i64: 256, 256>}, {pipeline_mode = #tpu.pipeline_mode<synchronous>, transform_indices = @transform_20, window_bounds = array<i64: 1, 256>}, {pipeline_mode = #tpu.pipeline_mode<synchronous>, transform_indices = @transform_21, window_bounds = array<i64: 256, 128>}, {pipeline_mode = #tpu.pipeline_mode<synchronous>, transform_indices = @transform_22, window_bounds = array<i64: 1, 128>}, {pipeline_mode = #tpu.pipeline_mode<synchronous>, transform_indices = @transform_23, window_bounds = array<i64: 128, 128>}, {pipeline_mode = #tpu.pipeline_mode<synchronous>, transform_indices = @transform_24, window_bounds = array<i64: 1, 128>}]} {
    %c0 = arith.constant 0 : index
    %c0_0 = arith.constant 0 : index
    %0 = vector.load %arg3[%c0, %c0_0] : memref<256x256xf32, #tpu.memory_space<vmem>>, vector<256x256xf32>
    %c0_1 = arith.constant 0 : index
    %c0_2 = arith.constant 0 : index
    %1 = vector.load %arg9[%c0_1, %c0_2] : memref<256x256xf32, #tpu.memory_space<vmem>>, vector<256x256xf32>
    %cst = arith.constant 9.990000e-01 : f32
    %2 = vector.broadcast %cst : f32 to vector<256x256xf32>
    %3 = arith.mulf %1, %2 : vector<256x256xf32>
    %cst_3 = arith.constant 1.000000e-03 : f32
    %4 = vector.broadcast %cst_3 : f32 to vector<256x256xf32>
    %5 = arith.mulf %0, %4 : vector<256x256xf32>
    %6 = arith.addf %3, %5 : vector<256x256xf32>
    %c0_4 = arith.constant 0 : index
    %c0_5 = arith.constant 0 : index
    %7 = vector.load %arg20[%c0_4, %c0_5] : memref<256x256xf32, #tpu.memory_space<vmem>>, vector<256x256xf32>
    tpu.vector_store %arg20[%c0_4, %c0_5], %6 {strides = array<i32>} : memref<256x256xf32, #tpu.memory_space<vmem>>, vector<256x256xf32>,
    %c0_i32 = arith.constant 0 : i32
    %8 = arith.cmpi eq, %arg0, %c0_i32 : i32
    %9 = arith.extui %8 : i1 to i32
    %c0_i32_6 = arith.constant 0 : i32
    %10 = arith.cmpi ne, %9, %c0_i32_6 : i32
    scf.if %10 {
      %cst_22 = arith.constant 0.000000e+00 : f32
      %26 = vector.broadcast %cst_22 : f32 to vector<2x256xf32>
      %c0_23 = arith.constant 0 : index
      %c0_24 = arith.constant 0 : index
      %27 = vector.load %arg26[%c0_23, %c0_24] : memref<2x256xf32, #tpu.memory_space<vmem>>, vector<2x256xf32>
      tpu.vector_store %arg26[%c0_23, %c0_24], %26 {strides = array<i32>} : memref<2x256xf32, #tpu.memory_space<vmem>>, vector<2x256xf32>,
      %cst_25 = arith.constant 0.000000e+00 : f32
      %28 = vector.broadcast %cst_25 : f32 to vector<2x256xf32>
      %c0_26 = arith.constant 0 : index
      %c0_27 = arith.constant 0 : index
      %29 = vector.load %arg27[%c0_26, %c0_27] : memref<2x256xf32, #tpu.memory_space<vmem>>, vector<2x256xf32>
      tpu.vector_store %arg27[%c0_26, %c0_27], %28 {strides = array<i32>} : memref<2x256xf32, #tpu.memory_space<vmem>>, vector<2x256xf32>,
    } else {
    }
    %c0_7 = arith.constant 0 : index
    %c0_8 = arith.constant 0 : index
    %11 = vector.load %arg26[%c0_7, %c0_8] : memref<2x256xf32, #tpu.memory_space<vmem>>, vector<2x256xf32>
    %c0_9 = arith.constant 0 : index
    %c0_10 = arith.constant 0 : index
    %12 = vector.load %arg1[%c0_9, %c0_10] : memref<2x256xbf16, #tpu.memory_space<vmem>>, vector<2x256xbf16>
    %13 = arith.truncf %0 : vector<256x256xf32> to vector<256x256xbf16>
    %cst_11 = arith.constant dense<0.000000e+00> : vector<2x256xf32>
    %14 = tpu.matmul %12, %13, %cst_11 {dimension_numbers = #tpu.dot_dimension_numbers<[1], [0], [0], [1], [0, 0, 1, 1], [], []>} : vector<2x256xbf16>, vector<256x256xbf16>, vector<2x256xf32> -> vector<2x256xf32>
    %15 = arith.addf %11, %14 : vector<2x256xf32>
    %c0_12 = arith.constant 0 : index
    %c0_13 = arith.constant 0 : index
    %16 = vector.load %arg26[%c0_12, %c0_13] : memref<2x256xf32, #tpu.memory_space<vmem>>, vector<2x256xf32>
    tpu.vector_store %arg26[%c0_12, %c0_13], %15 {strides = array<i32>} : memref<2x256xf32, #tpu.memory_space<vmem>>, vector<2x256xf32>,
    %c0_14 = arith.constant 0 : index
    %c0_15 = arith.constant 0 : index
    %17 = vector.load %arg27[%c0_14, %c0_15] : memref<2x256xf32, #tpu.memory_space<vmem>>, vector<2x256xf32>
    %c0_16 = arith.constant 0 : index
    %c0_17 = arith.constant 0 : index
    %18 = vector.load %arg2[%c0_16, %c0_17] : memref<2x256xbf16, #tpu.memory_space<vmem>>, vector<2x256xbf16>
    %19 = arith.truncf %6 : vector<256x256xf32> to vector<256x256xbf16>
    %cst_18 = arith.constant dense<0.000000e+00> : vector<2x256xf32>
    %20 = tpu.matmul %18, %19, %cst_18 {dimension_numbers = #tpu.dot_dimension_numbers<[1], [0], [0], [1], [0, 0, 1, 1], [], []>} : vector<2x256xbf16>, vector<256x256xbf16>, vector<2x256xf32> -> vector<2x256xf32>
    %21 = arith.addf %17, %20 : vector<2x256xf32>
    %c0_19 = arith.constant 0 : index
    %c0_20 = arith.constant 0 : index
    %22 = vector.load %arg27[%c0_19, %c0_20] : memref<2x256xf32, #tpu.memory_space<vmem>>, vector<2x256xf32>
    tpu.vector_store %arg27[%c0_19, %c0_20], %21 {strides = array<i32>} : memref<2x256xf32, #tpu.memory_space<vmem>>, vector<2x256xf32>,
    %c3_i32 = arith.constant 3 : i32
    %23 = arith.cmpi eq, %arg0, %c3_i32 : i32
    %24 = arith.extui %23 : i1 to i32
    %c0_i32_21 = arith.constant 0 : i32
    %25 = arith.cmpi ne, %24, %c0_i32_21 : i32
    scf.if %25 {
      %c0_22 = arith.constant 0 : index
      %c0_23 = arith.constant 0 : index
      %26 = vector.load %arg4[%c0_22, %c0_23] : memref<1x256xf32, #tpu.memory_space<vmem>>, vector<1x256xf32>
      %c0_24 = arith.constant 0 : index
      %c0_25 = arith.constant 0 : index
      %27 = vector.load %arg5[%c0_24, %c0_25] : memref<256x128xf32, #tpu.memory_space<vmem>>, vector<256x128xf32>
      %c0_26 = arith.constant 0 : index
      %c0_27 = arith.constant 0 : index
      %28 = vector.load %arg6[%c0_26, %c0_27] : memref<1x128xf32, #tpu.memory_space<vmem>>, vector<1x128xf32>
      %c0_28 = arith.constant 0 : index
      %c0_29 = arith.constant 0 : index
      %29 = vector.load %arg7[%c0_28, %c0_29] : memref<128x128xf32, #tpu.memory_space<vmem>>, vector<128x128xf32>
      %c0_30 = arith.constant 0 : index
      %c0_31 = arith.constant 0 : index
      %30 = vector.load %arg8[%c0_30, %c0_31] : memref<1x128xf32, #tpu.memory_space<vmem>>, vector<1x128xf32>
      %c0_32 = arith.constant 0 : index
      %c0_33 = arith.constant 0 : index
      %31 = vector.load %arg10[%c0_32, %c0_33] : memref<1x256xf32, #tpu.memory_space<vmem>>, vector<1x256xf32>
      %cst_34 = arith.constant 9.990000e-01 : f32
      %32 = vector.broadcast %cst_34 : f32 to vector<1x256xf32>
      %33 = arith.mulf %31, %32 : vector<1x256xf32>
      %cst_35 = arith.constant 1.000000e-03 : f32
      %34 = vector.broadcast %cst_35 : f32 to vector<1x256xf32>
      %35 = arith.mulf %26, %34 : vector<1x256xf32>
      %36 = arith.addf %33, %35 : vector<1x256xf32>
      %c0_36 = arith.constant 0 : index
      %c0_37 = arith.constant 0 : index
      %37 = vector.load %arg11[%c0_36, %c0_37] : memref<256x128xf32, #tpu.memory_space<vmem>>, vector<256x128xf32>
      %cst_38 = arith.constant 9.990000e-01 : f32
      %38 = vector.broadcast %cst_38 : f32 to vector<256x128xf32>
      %39 = arith.mulf %37, %38 : vector<256x128xf32>
      %cst_39 = arith.constant 1.000000e-03 : f32
      %40 = vector.broadcast %cst_39 : f32 to vector<256x128xf32>
      %41 = arith.mulf %27, %40 : vector<256x128xf32>
      %42 = arith.addf %39, %41 : vector<256x128xf32>
      %c0_40 = arith.constant 0 : index
      %c0_41 = arith.constant 0 : index
      %43 = vector.load %arg12[%c0_40, %c0_41] : memref<1x128xf32, #tpu.memory_space<vmem>>, vector<1x128xf32>
      %cst_42 = arith.constant 9.990000e-01 : f32
      %44 = vector.broadcast %cst_42 : f32 to vector<1x128xf32>
      %45 = arith.mulf %43, %44 : vector<1x128xf32>
      %cst_43 = arith.constant 1.000000e-03 : f32
      %46 = vector.broadcast %cst_43 : f32 to vector<1x128xf32>
      %47 = arith.mulf %28, %46 : vector<1x128xf32>
      %48 = arith.addf %45, %47 : vector<1x128xf32>
      %c0_44 = arith.constant 0 : index
      %c0_45 = arith.constant 0 : index
      %49 = vector.load %arg13[%c0_44, %c0_45] : memref<128x128xf32, #tpu.memory_space<vmem>>, vector<128x128xf32>
      %cst_46 = arith.constant 9.990000e-01 : f32
      %50 = vector.broadcast %cst_46 : f32 to vector<128x128xf32>
      %51 = arith.mulf %49, %50 : vector<128x128xf32>
      %cst_47 = arith.constant 1.000000e-03 : f32
      %52 = vector.broadcast %cst_47 : f32 to vector<128x128xf32>
      %53 = arith.mulf %29, %52 : vector<128x128xf32>
      %54 = arith.addf %51, %53 : vector<128x128xf32>
      %c0_48 = arith.constant 0 : index
      %c0_49 = arith.constant 0 : index
      %55 = vector.load %arg14[%c0_48, %c0_49] : memref<1x128xf32, #tpu.memory_space<vmem>>, vector<1x128xf32>
      %cst_50 = arith.constant 9.990000e-01 : f32
      %56 = vector.broadcast %cst_50 : f32 to vector<1x128xf32>
      %57 = arith.mulf %55, %56 : vector<1x128xf32>
      %cst_51 = arith.constant 1.000000e-03 : f32
      %58 = vector.broadcast %cst_51 : f32 to vector<1x128xf32>
      %59 = arith.mulf %30, %58 : vector<1x128xf32>
      %60 = arith.addf %57, %59 : vector<1x128xf32>
      %c0_52 = arith.constant 0 : index
      %c0_53 = arith.constant 0 : index
      %61 = vector.load %arg21[%c0_52, %c0_53] : memref<1x256xf32, #tpu.memory_space<vmem>>, vector<1x256xf32>
      tpu.vector_store %arg21[%c0_52, %c0_53], %36 {strides = array<i32>} : memref<1x256xf32, #tpu.memory_space<vmem>>, vector<1x256xf32>,
      %c0_54 = arith.constant 0 : index
      %c0_55 = arith.constant 0 : index
      %62 = vector.load %arg22[%c0_54, %c0_55] : memref<256x128xf32, #tpu.memory_space<vmem>>, vector<256x128xf32>
      tpu.vector_store %arg22[%c0_54, %c0_55], %42 {strides = array<i32>} : memref<256x128xf32, #tpu.memory_space<vmem>>, vector<256x128xf32>,
      %c0_56 = arith.constant 0 : index
      %c0_57 = arith.constant 0 : index
      %63 = vector.load %arg23[%c0_56, %c0_57] : memref<1x128xf32, #tpu.memory_space<vmem>>, vector<1x128xf32>
      tpu.vector_store %arg23[%c0_56, %c0_57], %48 {strides = array<i32>} : memref<1x128xf32, #tpu.memory_space<vmem>>, vector<1x128xf32>,
      %c0_58 = arith.constant 0 : index
      %c0_59 = arith.constant 0 : index
      %64 = vector.load %arg24[%c0_58, %c0_59] : memref<128x128xf32, #tpu.memory_space<vmem>>, vector<128x128xf32>
      tpu.vector_store %arg24[%c0_58, %c0_59], %54 {strides = array<i32>} : memref<128x128xf32, #tpu.memory_space<vmem>>, vector<128x128xf32>,
      %c0_60 = arith.constant 0 : index
      %c0_61 = arith.constant 0 : index
      %65 = vector.load %arg25[%c0_60, %c0_61] : memref<1x128xf32, #tpu.memory_space<vmem>>, vector<1x128xf32>
      tpu.vector_store %arg25[%c0_60, %c0_61], %60 {strides = array<i32>} : memref<1x128xf32, #tpu.memory_space<vmem>>, vector<1x128xf32>,
      %c0_62 = arith.constant 0 : index
      %c0_63 = arith.constant 0 : index
      %66 = vector.load %arg26[%c0_62, %c0_63] : memref<2x256xf32, #tpu.memory_space<vmem>>, vector<2x256xf32>
      %67 = vector.broadcast %26 : vector<1x256xf32> to vector<2x256xf32>
      %68 = arith.addf %66, %67 : vector<2x256xf32>
      %cst_64 = arith.constant 0.000000e+00 : f32
      %69 = vector.broadcast %cst_64 : f32 to vector<2x256xf32>
      %70 = arith.maximumf %68, %69 : vector<2x256xf32>
      %71 = arith.truncf %70 : vector<2x256xf32> to vector<2x256xbf16>
      %72 = arith.truncf %27 : vector<256x128xf32> to vector<256x128xbf16>
      %cst_65 = arith.constant dense<0.000000e+00> : vector<2x128xf32>
      %73 = tpu.matmul %71, %72, %cst_65 {dimension_numbers = #tpu.dot_dimension_numbers<[1], [0], [0], [1], [0, 0, 1, 1], [], []>} : vector<2x256xbf16>, vector<256x128xbf16>, vector<2x128xf32> -> vector<2x128xf32>
      %74 = vector.broadcast %28 : vector<1x128xf32> to vector<2x128xf32>
      %75 = arith.addf %73, %74 : vector<2x128xf32>
      %c0_66 = arith.constant 0 : index
      %c0_67 = arith.constant 0 : index
      %76 = vector.load %arg16[%c0_66, %c0_67] : memref<2x128xf32, #tpu.memory_space<vmem>>, vector<2x128xf32>
      tpu.vector_store %arg16[%c0_66, %c0_67], %75 {strides = array<i32>} : memref<2x128xf32, #tpu.memory_space<vmem>>, vector<2x128xf32>,
      %77 = arith.truncf %75 : vector<2x128xf32> to vector<2x128xbf16>
      %78 = arith.truncf %29 : vector<128x128xf32> to vector<128x128xbf16>
      %cst_68 = arith.constant dense<0.000000e+00> : vector<2x128xf32>
      %79 = tpu.matmul %77, %78, %cst_68 {dimension_numbers = #tpu.dot_dimension_numbers<[1], [0], [0], [1], [0, 0, 1, 1], [], []>} : vector<2x128xbf16>, vector<128x128xbf16>, vector<2x128xf32> -> vector<2x128xf32>
      %80 = vector.broadcast %30 : vector<1x128xf32> to vector<2x128xf32>
      %81 = arith.addf %79, %80 : vector<2x128xf32>
      %c0_69 = arith.constant 0 : index
      %c0_70 = arith.constant 0 : index
      %82 = vector.load %arg17[%c0_69, %c0_70] : memref<2x128xf32, #tpu.memory_space<vmem>>, vector<2x128xf32>
      tpu.vector_store %arg17[%c0_69, %c0_70], %81 {strides = array<i32>} : memref<2x128xf32, #tpu.memory_space<vmem>>, vector<2x128xf32>,
      %83 = arith.mulf %75, %75 : vector<2x128xf32>
      %cst_71 = arith.constant dense<0.000000e+00> : vector<2xf32>
      %84 = vector.multi_reduction <add>, %83, %cst_71 [1] : vector<2x128xf32> to vector<2xf32>
      %85 = vector.shape_cast %84 : vector<2xf32> to vector<2x1xf32>
      %cst_72 = arith.constant 1.000000e-24 : f32
      %86 = vector.broadcast %cst_72 : f32 to vector<2x1xf32>
      %87 = arith.maximumf %85, %86 : vector<2x1xf32>
      %88 = math.rsqrt %87 : vector<2x1xf32>
      %89 = vector.broadcast %88 : vector<2x1xf32> to vector<2x128xf32>
      %90 = arith.mulf %75, %89 : vector<2x128xf32>
      %c0_73 = arith.constant 0 : index
      %c0_74 = arith.constant 0 : index
      %91 = vector.load %arg27[%c0_73, %c0_74] : memref<2x256xf32, #tpu.memory_space<vmem>>, vector<2x256xf32>
      %92 = vector.broadcast %36 : vector<1x256xf32> to vector<2x256xf32>
      %93 = arith.addf %91, %92 : vector<2x256xf32>
      %cst_75 = arith.constant 0.000000e+00 : f32
      %94 = vector.broadcast %cst_75 : f32 to vector<2x256xf32>
      %95 = arith.maximumf %93, %94 : vector<2x256xf32>
      %96 = arith.truncf %95 : vector<2x256xf32> to vector<2x256xbf16>
      %97 = arith.truncf %42 : vector<256x128xf32> to vector<256x128xbf16>
      %cst_76 = arith.constant dense<0.000000e+00> : vector<2x128xf32>
      %98 = tpu.matmul %96, %97, %cst_76 {dimension_numbers = #tpu.dot_dimension_numbers<[1], [0], [0], [1], [0, 0, 1, 1], [], []>} : vector<2x256xbf16>, vector<256x128xbf16>, vector<2x128xf32> -> vector<2x128xf32>
      %99 = vector.broadcast %48 : vector<1x128xf32> to vector<2x128xf32>
      %100 = arith.addf %98, %99 : vector<2x128xf32>
      %101 = arith.mulf %100, %100 : vector<2x128xf32>
      %cst_77 = arith.constant dense<0.000000e+00> : vector<2xf32>
      %102 = vector.multi_reduction <add>, %101, %cst_77 [1] : vector<2x128xf32> to vector<2xf32>
      %103 = vector.shape_cast %102 : vector<2xf32> to vector<2x1xf32>
      %cst_78 = arith.constant 1.000000e-24 : f32
      %104 = vector.broadcast %cst_78 : f32 to vector<2x1xf32>
      %105 = arith.maximumf %103, %104 : vector<2x1xf32>
      %106 = math.rsqrt %105 : vector<2x1xf32>
      %107 = vector.broadcast %106 : vector<2x1xf32> to vector<2x128xf32>
      %108 = arith.mulf %100, %107 : vector<2x128xf32>
      %c0_79 = arith.constant 0 : index
      %c0_80 = arith.constant 0 : index
      %109 = vector.load %arg19[%c0_79, %c0_80] : memref<2x128xf32, #tpu.memory_space<vmem>>, vector<2x128xf32>
      tpu.vector_store %arg19[%c0_79, %c0_80], %108 {strides = array<i32>} : memref<2x128xf32, #tpu.memory_space<vmem>>, vector<2x128xf32>,
      %110 = arith.truncf %90 : vector<2x128xf32> to vector<2x128xbf16>
      %c0_81 = arith.constant 0 : index
      %c0_82 = arith.constant 0 : index
      %111 = vector.load %arg15[%c0_81, %c0_82] : memref<128x384xbf16, #tpu.memory_space<vmem>>, vector<128x384xbf16>
      %cst_83 = arith.constant dense<0.000000e+00> : vector<2x384xf32>
      %112 = tpu.matmul %110, %111, %cst_83 {dimension_numbers = #tpu.dot_dimension_numbers<[1], [0], [0], [1], [0, 0, 1, 1], [], []>} : vector<2x128xbf16>, vector<128x384xbf16>, vector<2x384xf32> -> vector<2x384xf32>
      %113 = arith.mulf %90, %108 : vector<2x128xf32>
      %cst_84 = arith.constant dense<0.000000e+00> : vector<2xf32>
      %114 = vector.multi_reduction <add>, %113, %cst_84 [1] : vector<2x128xf32> to vector<2xf32>
      %115 = vector.shape_cast %114 : vector<2xf32> to vector<2x1xf32>
      %116 = tpu.iota {dimensions = array<i32: 1>} : vector<2x384xi32>
      %c0_i32_85 = arith.constant 0 : i32
      %117 = vector.broadcast %c0_i32_85 : i32 to vector<2x384xi32>
      %118 = arith.cmpi eq, %116, %117 : vector<2x384xi32>
      %119 = vector.shape_cast %115 : vector<2x1xf32> to vector<2x1xf32>
      %120 = vector.broadcast %119 : vector<2x1xf32> to vector<2x384xf32>
      %121 = arith.select %118, %120, %112 : vector<2x384xi1>, vector<2x384xf32>
      %cst_86 = arith.constant 14.2857141 : f32
      %122 = vector.broadcast %cst_86 : f32 to vector<2x384xf32>
      %123 = arith.mulf %121, %122 : vector<2x384xf32>
      %c0_87 = arith.constant 0 : index
      %c0_88 = arith.constant 0 : index
      %124 = vector.load %arg18[%c0_87, %c0_88] : memref<2x384xf32, #tpu.memory_space<vmem>>, vector<2x384xf32>
      tpu.vector_store %arg18[%c0_87, %c0_88], %123 {strides = array<i32>} : memref<2x384xf32, #tpu.memory_space<vmem>>, vector<2x384xf32>,
    } else {
    }
    return
  }
  func.func @transform_0(%arg0: i32) -> (i32, i32) {
    %c0_i32 = arith.constant 0 : i32
    %c0_i32_0 = arith.constant 0 : i32
    return %c0_i32, %arg0 : i32, i32
  }
  func.func @transform_1(%arg0: i32) -> (i32, i32) {
    %c0_i32 = arith.constant 0 : i32
    %c0_i32_0 = arith.constant 0 : i32
    return %c0_i32, %arg0 : i32, i32
  }
  func.func @transform_2(%arg0: i32) -> (i32, i32) {
    %c0_i32 = arith.constant 0 : i32
    %c0_i32_0 = arith.constant 0 : i32
    return %arg0, %c0_i32 : i32, i32
  }
  func.func @transform_3(%arg0: i32) -> (i32, i32) {
    %c0_i32 = arith.constant 0 : i32
    %c0_i32_0 = arith.constant 0 : i32
    %c0_i32_1 = arith.constant 0 : i32
    return %c0_i32, %c0_i32_0 : i32, i32
  }
  func.func @transform_4(%arg0: i32) -> (i32, i32) {
    %c0_i32 = arith.constant 0 : i32
    %c0_i32_0 = arith.constant 0 : i32
    %c0_i32_1 = arith.constant 0 : i32
    return %c0_i32, %c0_i32_0 : i32, i32
  }
  func.func @transform_5(%arg0: i32) -> (i32, i32) {
    %c0_i32 = arith.constant 0 : i32
    %c0_i32_0 = arith.constant 0 : i32
    %c0_i32_1 = arith.constant 0 : i32
    return %c0_i32, %c0_i32_0 : i32, i32
  }
  func.func @transform_6(%arg0: i32) -> (i32, i32) {
    %c0_i32 = arith.constant 0 : i32
    %c0_i32_0 = arith.constant 0 : i32
    %c0_i32_1 = arith.constant 0 : i32
    return %c0_i32, %c0_i32_0 : i32, i32
  }
  func.func @transform_7(%arg0: i32) -> (i32, i32) {
    %c0_i32 = arith.constant 0 : i32
    %c0_i32_0 = arith.constant 0 : i32
    %c0_i32_1 = arith.constant 0 : i32
    return %c0_i32, %c0_i32_0 : i32, i32
  }
  func.func @transform_8(%arg0: i32) -> (i32, i32) {
    %c0_i32 = arith.constant 0 : i32
    %c0_i32_0 = arith.constant 0 : i32
    return %arg0, %c0_i32 : i32, i32
  }
  func.func @transform_9(%arg0: i32) -> (i32, i32) {
    %c0_i32 = arith.constant 0 : i32
    %c0_i32_0 = arith.constant 0 : i32
    %c0_i32_1 = arith.constant 0 : i32
    return %c0_i32, %c0_i32_0 : i32, i32
  }
  func.func @transform_10(%arg0: i32) -> (i32, i32) {
    %c0_i32 = arith.constant 0 : i32
    %c0_i32_0 = arith.constant 0 : i32
    %c0_i32_1 = arith.constant 0 : i32
    return %c0_i32, %c0_i32_0 : i32, i32
  }
  func.func @transform_11(%arg0: i32) -> (i32, i32) {
    %c0_i32 = arith.constant 0 : i32
    %c0_i32_0 = arith.constant 0 : i32
    %c0_i32_1 = arith.constant 0 : i32
    return %c0_i32, %c0_i32_0 : i32, i32
  }
  func.func @transform_12(%arg0: i32) -> (i32, i32) {
    %c0_i32 = arith.constant 0 : i32
    %c0_i32_0 = arith.constant 0 : i32
    %c0_i32_1 = arith.constant 0 : i32
    return %c0_i32, %c0_i32_0 : i32, i32
  }
  func.func @transform_13(%arg0: i32) -> (i32, i32) {
    %c0_i32 = arith.constant 0 : i32
    %c0_i32_0 = arith.constant 0 : i32
    %c0_i32_1 = arith.constant 0 : i32
    return %c0_i32, %c0_i32_0 : i32, i32
  }
  func.func @transform_14(%arg0: i32) -> (i32, i32) {
    %c0_i32 = arith.constant 0 : i32
    %c0_i32_0 = arith.constant 0 : i32
    %c0_i32_1 = arith.constant 0 : i32
    return %c0_i32, %c0_i32_0 : i32, i32
  }
  func.func @transform_15(%arg0: i32) -> (i32, i32) {
    %c0_i32 = arith.constant 0 : i32
    %c0_i32_0 = arith.constant 0 : i32
    %c0_i32_1 = arith.constant 0 : i32
    return %c0_i32, %c0_i32_0 : i32, i32
  }
  func.func @transform_16(%arg0: i32) -> (i32, i32) {
    %c0_i32 = arith.constant 0 : i32
    %c0_i32_0 = arith.constant 0 : i32
    %c0_i32_1 = arith.constant 0 : i32
    return %c0_i32, %c0_i32_0 : i32, i32
  }
  func.func @transform_17(%arg0: i32) -> (i32, i32) {
    %c0_i32 = arith.constant 0 : i32
    %c0_i32_0 = arith.constant 0 : i32
    %c0_i32_1 = arith.constant 0 : i32
    return %c0_i32, %c0_i32_0 : i32, i32
  }
  func.func @transform_18(%arg0: i32) -> (i32, i32) {
    %c0_i32 = arith.constant 0 : i32
    %c0_i32_0 = arith.constant 0 : i32
    %c0_i32_1 = arith.constant 0 : i32
    return %c0_i32, %c0_i32_0 : i32, i32
  }
  func.func @transform_19(%arg0: i32) -> (i32, i32) {
    %c0_i32 = arith.constant 0 : i32
    %c0_i32_0 = arith.constant 0 : i32
    return %arg0, %c0_i32 : i32, i32
  }
  func.func @transform_20(%arg0: i32) -> (i32, i32) {
    %c0_i32 = arith.constant 0 : i32
    %c0_i32_0 = arith.constant 0 : i32
    %c0_i32_1 = arith.constant 0 : i32
    return %c0_i32, %c0_i32_0 : i32, i32
  }
  func.func @transform_21(%arg0: i32) -> (i32, i32) {
    %c0_i32 = arith.constant 0 : i32
    %c0_i32_0 = arith.constant 0 : i32
    %c0_i32_1 = arith.constant 0 : i32
    return %c0_i32, %c0_i32_0 : i32, i32
  }
  func.func @transform_22(%arg0: i32) -> (i32, i32) {
    %c0_i32 = arith.constant 0 : i32
    %c0_i32_0 = arith.constant 0 : i32
    %c0_i32_1 = arith.constant 0 : i32
    return %c0_i32, %c0_i32_0 : i32, i32
  }
  func.func @transform_23(%arg0: i32) -> (i32, i32) {
    %c0_i32 = arith.constant 0 : i32
    %c0_i32_0 = arith.constant 0 : i32
    %c0_i32_1 = arith.constant 0 : i32
    return %c0_i32, %c0_i32_0 : i32, i32
  }
  func.func @transform_24(%arg0: i32) -> (i32, i32) {
    %c0_i32 = arith.constant 0 : i32
    %c0_i32_0 = arith.constant 0 : i32
    %c0_i32_1 = arith.constant 0 : i32
    return %c0_i32, %c0_i32_0 : i32, i32
  }
}

</mosaic_0001>

<llo_original>
// kernel: adamoco_forward.1
$region0: #{adamoco_forward.1}
  #allocation0 [shape = 'u32[]', space=smem, size = 0x4, offset = 0x4, fixed_abs, tag = 'smem constant byte address 0x4 - core index']
  #allocation1 [shape = 'u32[144,128]{1,0:T(1,128)}', space=vmem, size = 0x12000, scoped, tag = 'internal scratch']
  #allocation2 [shape = 'f32[2,256]{1,0:T(2,128)}', space=vmem, size = 0x800, scoped, tag = 'scratch operand']
  #allocation3 [shape = 'f32[2,256]{1,0:T(2,128)}', space=vmem, size = 0x800, scoped, tag = 'scratch operand']
  %s0 = inlined_call_operand.vmem [shape: bf16[2,1024], index: 0, kind: input, shape index: {}]
  %s1 = inlined_call_operand.vmem [shape: bf16[2,1024], index: 1, kind: input, shape index: {}]
  %s2 = inlined_call_operand.vmem [shape: f32[1024,256], index: 2, kind: input, shape index: {}]
  %s3 = inlined_call_operand.vmem [shape: f32[1,256], index: 3, kind: input, shape index: {}]
  %s4 = inlined_call_operand.vmem [shape: f32[256,128], index: 4, kind: input, shape index: {}]
  %s5 = inlined_call_operand.vmem [shape: f32[1,128], index: 5, kind: input, shape index: {}]
  %s6 = inlined_call_operand.vmem [shape: f32[128,128], index: 6, kind: input, shape index: {}]
  %s7 = inlined_call_operand.vmem [shape: f32[1,128], index: 7, kind: input, shape index: {}]
  %s8 = inlined_call_operand.vmem [shape: f32[1024,256], index: 8, kind: input, shape index: {}, may-alias: {8,19}]
  %s9 = inlined_call_operand.vmem [shape: f32[1,256], index: 9, kind: input, shape index: {}, may-alias: {9,20}]
  %s10 = inlined_call_operand.vmem [shape: f32[256,128], index: 10, kind: input, shape index: {}, may-alias: {10,21}]
  %s11 = inlined_call_operand.vmem [shape: f32[1,128], index: 11, kind: input, shape index: {}, may-alias: {11,22}]
  %s12 = inlined_call_operand.vmem [shape: f32[128,128], index: 12, kind: input, shape index: {}, may-alias: {12,23}]
  %s13 = inlined_call_operand.vmem [shape: f32[1,128], index: 13, kind: input, shape index: {}, may-alias: {13,24}]
  %s14 = inlined_call_operand.vmem [shape: bf16[128,384], index: 14, kind: input, shape index: {}]
  %s15 = inlined_call_operand.hbm [shape: f32[2,128], index: 15, kind: output, shape index: {0}]
  %s16 = inlined_call_operand.hbm [shape: f32[2,128], index: 16, kind: output, shape index: {1}]
  %s17 = inlined_call_operand.hbm [shape: f32[2,384], index: 17, kind: output, shape index: {2}]
  %s18 = inlined_call_operand.hbm [shape: f32[2,128], index: 18, kind: output, shape index: {3}]
  %s19 = inlined_call_operand.vmem [shape: f32[1024,256], index: 19, kind: output, shape index: {4}, may-alias: {8,19}]
  %s20 = inlined_call_operand.vmem [shape: f32[1,256], index: 20, kind: output, shape index: {5}, may-alias: {9,20}]
  %s21 = inlined_call_operand.vmem [shape: f32[256,128], index: 21, kind: output, shape index: {6}, may-alias: {10,21}]
  %s22 = inlined_call_operand.vmem [shape: f32[1,128], index: 22, kind: output, shape index: {7}, may-alias: {11,22}]
  %s23 = inlined_call_operand.vmem [shape: f32[128,128], index: 23, kind: output, shape index: {8}, may-alias: {12,23}]
  %s24 = inlined_call_operand.vmem [shape: f32[1,128], index: 24, kind: output, shape index: {9}, may-alias: {13,24}]
  %25 = xla_tuple %s15, %s16, %s17, %s18, %s19, %s20, %s21, %s22, %s23, %s24
  %s26 = sld [smem:[#allocation0]]
  $region173: #{adamoco_forward.1} parent=0
    _
  %s28 = ssub.s32 1, %s26
  %s29 = scalar_select 0, %s28, %s26
  $region1: #{adamoco_forward.1} parent=0
    #allocation4 [shape = 'u8[1024]{0}', space=vmem, size = 0x400, scoped, tag = 'output window, operand 0, single buffered']
    #allocation5 [shape = 's32[2]{0}', space=sflag, size = 0x8, scoped, tag = 'scoped memory for adamoco_forward.1']
    #allocation6 [shape = 'u8[1024]{0}', space=vmem, size = 0x400, scoped, tag = 'output window, operand 1, single buffered']
    #allocation7 [shape = 's32[1]{0}', space=sflag, size = 0x4, scoped, tag = 'scoped memory for adamoco_forward.1']
    #allocation8 [shape = 'u8[3072]{0}', space=vmem, size = 0xc00, scoped, tag = 'output window, operand 2, single buffered']
    #allocation9 [shape = 'u8[1024]{0}', space=vmem, size = 0x400, scoped, tag = 'output window, operand 3, single buffered']
    #allocation10 [shape = 's32[1]{0}', space=sflag, size = 0x4, scoped, tag = 'scoped memory for adamoco_forward.1']
    %30 = vsyncpa [#allocation5], 0
    %31 = vsyncpa [#allocation7], 0
    %32 = vsyncpa [#allocation10], 0
    loop: start=0, step=1, limit=6
    $region2: #{adamoco_forward.1} parent=1 // loop_pre_header
      _
    $region3: #{adamoco_forward.1} parent=1 // loop_header
      %s34 = sphi 0, %s38
      %p35 = scmp.ge.s32.totalorder %s34, 6
      %s44 = sphi 0, %s46
      %s47 = sphi 0, %s44
      %s48 = sphi 0, %s47
      %s64 = sphi 0, %s48
      %s70 = sphi 0, %s72
      %s73 = sphi 0, %s70
      %s74 = sphi 0, %s73
      %s90 = sphi 0, %s74
      %s96 = sphi 0, %s98
      %s99 = sphi 0, %s96
      %s100 = sphi 0, %s99
      %s116 = sphi 0, %s100
      %s120 = sphi 0, %s120
      %s122 = sphi 0, %s120
      %s123 = sphi 0, %s122
      %s137 = sphi 0, %s123
      %s141 = sphi 0, %s141
      %s143 = sphi 0, %s141
      %s144 = sphi 0, %s143
      %s158 = sphi 0, %s144
      %s162 = sphi 0, %s162
      %s164 = sphi 0, %s162
      %s165 = sphi 0, %s164
      %s179 = sphi 0, %s165
      %s183 = sphi 0, %s183
      %s185 = sphi 0, %s183
      %s186 = sphi 0, %s185
      %s200 = sphi 0, %s186
      %s204 = sphi 0, %s204
      %s206 = sphi 0, %s204
      %s207 = sphi 0, %s206
      %s221 = sphi 0, %s207
      %s227 = sphi 0, %s229
      %s230 = sphi 0, %s227
      %s231 = sphi 0, %s230
      %s247 = sphi 0, %s231
      %s251 = sphi 0, %s251
      %s253 = sphi 0, %s251
      %s254 = sphi 0, %s253
      %s268 = sphi 0, %s254
      %s272 = sphi 0, %s272
      %s274 = sphi 0, %s272
      %s275 = sphi 0, %s274
      %s289 = sphi 0, %s275
      %s293 = sphi 0, %s293
      %s295 = sphi 0, %s293
      %s296 = sphi 0, %s295
      %s310 = sphi 0, %s296
      %s314 = sphi 0, %s314
      %s316 = sphi 0, %s314
      %s317 = sphi 0, %s316
      %s331 = sphi 0, %s317
      %s335 = sphi 0, %s335
      %s337 = sphi 0, %s335
      %s338 = sphi 0, %s337
      %s352 = sphi 0, %s338
      %s356 = sphi 0, %s356
      %s358 = sphi 0, %s356
      %s359 = sphi 0, %s358
      %s373 = sphi 0, %s359
      %s377 = sphi 0, %s377
      %s379 = sphi 0, %s377
      %s380 = sphi 0, %s379
      %s394 = sphi 0, %s380
      %s398 = sphi 0, %s398
      %s400 = sphi 0, %s398
      %s401 = sphi 0, %s400
      %s415 = sphi 0, %s401
      %s419 = sphi 0, %s419
      %s421 = sphi 0, %s419
      %s422 = sphi 0, %s421
      %s436 = sphi 0, %s422
      %s440 = sphi 0, %s440
      %s442 = sphi 0, %s440
      %s443 = sphi 0, %s442
      %s457 = sphi 0, %s443
      %s463 = sphi 0, %s465
      %s466 = sphi 0, %s463
      %s467 = sphi 0, %s466
      %s483 = sphi 0, %s467
      %s487 = sphi 0, %s487
      %s489 = sphi 0, %s487
      %s490 = sphi 0, %s489
      %s504 = sphi 0, %s490
      %s508 = sphi 0, %s508
      %s510 = sphi 0, %s508
      %s511 = sphi 0, %s510
      %s525 = sphi 0, %s511
      %s529 = sphi 0, %s529
      %s531 = sphi 0, %s529
      %s532 = sphi 0, %s531
      %s546 = sphi 0, %s532
      %s550 = sphi 0, %s550
      %s552 = sphi 0, %s550
      %s553 = sphi 0, %s552
      %s567 = sphi 0, %s553
      %s571 = sphi 0, %s571
      %s573 = sphi 0, %s571
      %s574 = sphi 0, %s573
      %s588 = sphi 0, %s574
    $region4: #{adamoco_forward.1} parent=1 // loop_header_branch
      %37 = sbr.rel (%p35) target = $region8
    $region5: #{adamoco_forward.1} parent=1 // loop_body
      %s39 = ssub.s32 %s34, 1
      %s40 = ssub.s32 %s34, 2
      %s41 = sadd.s32 %s34, 1
      %s42 = ssub.s32 %s34, %s41
      %p43 = scmp.eq.s32.totalorder %s42, 0
      %s45 = sadd.s32 %s44, 1
      %s46 = scalar_select %p43, %s44, %s45
      %p49 = pneg %p43
      %p50 = scmp.eq.s32.totalorder %s34, 3
      %p51 = por %p49, %p50
      %p52 = scmp.ne.s32.totalorder %s44, %s47
      %p53 = scmp.eq.s32.totalorder %s34, 0
      %p54 = por %p52, %p53
      %p55 = scmp.ne.s32.totalorder %s44, %s47
      %p56 = scmp.eq.s32.totalorder %s39, 3
      %p57 = por %p55, %p56
      %p58 = scmp.ne.s32.totalorder %s47, %s48
      %p59 = scmp.eq.s32.totalorder %s39, 0
      %p60 = por %p58, %p59
      %p61 = scmp.ne.s32.totalorder %s47, %s48
      %p62 = scmp.eq.s32.totalorder %s40, 3
      %p63 = por %p61, %p62
      %p65 = scmp.ne.s32.totalorder %s48, %s64
      %p66 = scmp.eq.s32.totalorder %s40, 0
      %p67 = por %p65, %p66
      %s68 = ssub.s32 %s34, %s41
      %p69 = scmp.eq.s32.totalorder %s68, 0
      %s71 = sadd.s32 %s70, 1
      %s72 = scalar_select %p69, %s70, %s71
      %p75 = pneg %p69
      %p76 = scmp.eq.s32.totalorder %s34, 3
      %p77 = por %p75, %p76
      %p78 = scmp.ne.s32.totalorder %s70, %s73
      %p79 = scmp.eq.s32.totalorder %s34, 0
      %p80 = por %p78, %p79
      %p81 = scmp.ne.s32.totalorder %s70, %s73
      %p82 = scmp.eq.s32.totalorder %s39, 3
      %p83 = por %p81, %p82
      %p84 = scmp.ne.s32.totalorder %s73, %s74
      %p85 = scmp.eq.s32.totalorder %s39, 0
      %p86 = por %p84, %p85
      %p87 = scmp.ne.s32.totalorder %s73, %s74
      %p88 = scmp.eq.s32.totalorder %s40, 3
      %p89 = por %p87, %p88
      %p91 = scmp.ne.s32.totalorder %s74, %s90
      %p92 = scmp.eq.s32.totalorder %s40, 0
      %p93 = por %p91, %p92
      %s94 = ssub.s32 %s34, %s41
      %p95 = scmp.eq.s32.totalorder %s94, 0
      %s97 = sadd.s32 %s96, 1
      %s98 = scalar_select %p95, %s96, %s97
      %p101 = pneg %p95
      %p102 = scmp.eq.s32.totalorder %s34, 3
      %p103 = por %p101, %p102
      %p104 = scmp.ne.s32.totalorder %s96, %s99
      %p105 = scmp.eq.s32.totalorder %s34, 0
      %p106 = por %p104, %p105
      %p107 = scmp.ne.s32.totalorder %s96, %s99
      %p108 = scmp.eq.s32.totalorder %s39, 3
      %p109 = por %p107, %p108
      %p110 = scmp.ne.s32.totalorder %s99, %s100
      %p111 = scmp.eq.s32.totalorder %s39, 0
      %p112 = por %p110, %p111
      %p113 = scmp.ne.s32.totalorder %s99, %s100
      %p114 = scmp.eq.s32.totalorder %s40, 3
      %p115 = por %p113, %p114
      %p117 = scmp.ne.s32.totalorder %s100, %s116
      %p118 = scmp.eq.s32.totalorder %s40, 0
      %p119 = por %p117, %p118
      %s121 = sadd.s32 %s120, 1
      %p124 = scmp.eq.s32.totalorder %s34, 3
      %p125 = scmp.ne.s32.totalorder %s120, %s122
      %p126 = scmp.eq.s32.totalorder %s34, 0
      %p127 = por %p125, %p126
      %p128 = scmp.ne.s32.totalorder %s120, %s122
      %p129 = scmp.eq.s32.totalorder %s39, 3
      %p130 = por %p128, %p129
      %p131 = scmp.ne.s32.totalorder %s122, %s123
      %p132 = scmp.eq.s32.totalorder %s39, 0
      %p133 = por %p131, %p132
      %p134 = scmp.ne.s32.totalorder %s122, %s123
      %p135 = scmp.eq.s32.totalorder %s40, 3
      %p136 = por %p134, %p135
      %p138 = scmp.ne.s32.totalorder %s123, %s137
      %p139 = scmp.eq.s32.totalorder %s40, 0
      %p140 = por %p138, %p139
      %s142 = sadd.s32 %s141, 1
      %p145 = scmp.eq.s32.totalorder %s34, 3
      %p146 = scmp.ne.s32.totalorder %s141, %s143
      %p147 = scmp.eq.s32.totalorder %s34, 0
      %p148 = por %p146, %p147
      %p149 = scmp.ne.s32.totalorder %s141, %s143
      %p150 = scmp.eq.s32.totalorder %s39, 3
      %p151 = por %p149, %p150
      %p152 = scmp.ne.s32.totalorder %s143, %s144
      %p153 = scmp.eq.s32.totalorder %s39, 0
      %p154 = por %p152, %p153
      %p155 = scmp.ne.s32.totalorder %s143, %s144
      %p156 = scmp.eq.s32.totalorder %s40, 3
      %p157 = por %p155, %p156
      %p159 = scmp.ne.s32.totalorder %s144, %s158
      %p160 = scmp.eq.s32.totalorder %s40, 0
      %p161 = por %p159, %p160
      %s163 = sadd.s32 %s162, 1
      %p166 = scmp.eq.s32.totalorder %s34, 3
      %p167 = scmp.ne.s32.totalorder %s162, %s164
      %p168 = scmp.eq.s32.totalorder %s34, 0
      %p169 = por %p167, %p168
      %p170 = scmp.ne.s32.totalorder %s162, %s164
      %p171 = scmp.eq.s32.totalorder %s39, 3
      %p172 = por %p170, %p171
      %p173 = scmp.ne.s32.totalorder %s164, %s165
      %p174 = scmp.eq.s32.totalorder %s39, 0
      %p175 = por %p173, %p174
      %p176 = scmp.ne.s32.totalorder %s164, %s165
      %p177 = scmp.eq.s32.totalorder %s40, 3
      %p178 = por %p176, %p177
      %p180 = scmp.ne.s32.totalorder %s165, %s179
      %p181 = scmp.eq.s32.totalorder %s40, 0
      %p182 = por %p180, %p181
      %s184 = sadd.s32 %s183, 1
      %p187 = scmp.eq.s32.totalorder %s34, 3
      %p188 = scmp.ne.s32.totalorder %s183, %s185
      %p189 = scmp.eq.s32.totalorder %s34, 0
      %p190 = por %p188, %p189
      %p191 = scmp.ne.s32.totalorder %s183, %s185
      %p192 = scmp.eq.s32.totalorder %s39, 3
      %p193 = por %p191, %p192
      %p194 = scmp.ne.s32.totalorder %s185, %s186
      %p195 = scmp.eq.s32.totalorder %s39, 0
      %p196 = por %p194, %p195
      %p197 = scmp.ne.s32.totalorder %s185, %s186
      %p198 = scmp.eq.s32.totalorder %s40, 3
      %p199 = por %p197, %p198
      %p201 = scmp.ne.s32.totalorder %s186, %s200
      %p202 = scmp.eq.s32.totalorder %s40, 0
      %p203 = por %p201, %p202
      %s205 = sadd.s32 %s204, 1
      %p208 = scmp.eq.s32.totalorder %s34, 3
      %p209 = scmp.ne.s32.totalorder %s204, %s206
      %p210 = scmp.eq.s32.totalorder %s34, 0
      %p211 = por %p209, %p210
      %p212 = scmp.ne.s32.totalorder %s204, %s206
      %p213 = scmp.eq.s32.totalorder %s39, 3
      %p214 = por %p212, %p213
      %p215 = scmp.ne.s32.totalorder %s206, %s207
      %p216 = scmp.eq.s32.totalorder %s39, 0
      %p217 = por %p215, %p216
      %p218 = scmp.ne.s32.totalorder %s206, %s207
      %p219 = scmp.eq.s32.totalorder %s40, 3
      %p220 = por %p218, %p219
      %p222 = scmp.ne.s32.totalorder %s207, %s221
      %p223 = scmp.eq.s32.totalorder %s40, 0
      %p224 = por %p222, %p223
      %s225 = ssub.s32 %s34, %s41
      %p226 = scmp.eq.s32.totalorder %s225, 0
      %s228 = sadd.s32 %s227, 1
      %s229 = scalar_select %p226, %s227, %s228
      %p232 = pneg %p226
      %p233 = scmp.eq.s32.totalorder %s34, 3
      %p234 = por %p232, %p233
      %p235 = scmp.ne.s32.totalorder %s227, %s230
      %p236 = scmp.eq.s32.totalorder %s34, 0
      %p237 = por %p235, %p236
      %p238 = scmp.ne.s32.totalorder %s227, %s230
      %p239 = scmp.eq.s32.totalorder %s39, 3
      %p240 = por %p238, %p239
      %p241 = scmp.ne.s32.totalorder %s230, %s231
      %p242 = scmp.eq.s32.totalorder %s39, 0
      %p243 = por %p241, %p242
      %p244 = scmp.ne.s32.totalorder %s230, %s231
      %p245 = scmp.eq.s32.totalorder %s40, 3
      %p246 = por %p244, %p245
      %p248 = scmp.ne.s32.totalorder %s231, %s247
      %p249 = scmp.eq.s32.totalorder %s40, 0
      %p250 = por %p248, %p249
      %s252 = sadd.s32 %s251, 1
      %p255 = scmp.eq.s32.totalorder %s34, 3
      %p256 = scmp.ne.s32.totalorder %s251, %s253
      %p257 = scmp.eq.s32.totalorder %s34, 0
      %p258 = por %p256, %p257
      %p259 = scmp.ne.s32.totalorder %s251, %s253
      %p260 = scmp.eq.s32.totalorder %s39, 3
      %p261 = por %p259, %p260
      %p262 = scmp.ne.s32.totalorder %s253, %s254
      %p263 = scmp.eq.s32.totalorder %s39, 0
      %p264 = por %p262, %p263
      %p265 = scmp.ne.s32.totalorder %s253, %s254
      %p266 = scmp.eq.s32.totalorder %s40, 3
      %p267 = por %p265, %p266
      %p269 = scmp.ne.s32.totalorder %s254, %s268
      %p270 = scmp.eq.s32.totalorder %s40, 0
      %p271 = por %p269, %p270
      %s273 = sadd.s32 %s272, 1
      %p276 = scmp.eq.s32.totalorder %s34, 3
      %p277 = scmp.ne.s32.totalorder %s272, %s274
      %p278 = scmp.eq.s32.totalorder %s34, 0
      %p279 = por %p277, %p278
      %p280 = scmp.ne.s32.totalorder %s272, %s274
      %p281 = scmp.eq.s32.totalorder %s39, 3
      %p282 = por %p280, %p281
      %p283 = scmp.ne.s32.totalorder %s274, %s275
      %p284 = scmp.eq.s32.totalorder %s39, 0
      %p285 = por %p283, %p284
      %p286 = scmp.ne.s32.totalorder %s274, %s275
      %p287 = scmp.eq.s32.totalorder %s40, 3
      %p288 = por %p286, %p287
      %p290 = scmp.ne.s32.totalorder %s275, %s289
      %p291 = scmp.eq.s32.totalorder %s40, 0
      %p292 = por %p290, %p291
      %s294 = sadd.s32 %s293, 1
      %p297 = scmp.eq.s32.totalorder %s34, 3
      %p298 = scmp.ne.s32.totalorder %s293, %s295
      %p299 = scmp.eq.s32.totalorder %s34, 0
      %p300 = por %p298, %p299
      %p301 = scmp.ne.s32.totalorder %s293, %s295
      %p302 = scmp.eq.s32.totalorder %s39, 3
      %p303 = por %p301, %p302
      %p304 = scmp.ne.s32.totalorder %s295, %s296
      %p305 = scmp.eq.s32.totalorder %s39, 0
      %p306 = por %p304, %p305
      %p307 = scmp.ne.s32.totalorder %s295, %s296
      %p308 = scmp.eq.s32.totalorder %s40, 3
      %p309 = por %p307, %p308
      %p311 = scmp.ne.s32.totalorder %s296, %s310
      %p312 = scmp.eq.s32.totalorder %s40, 0
      %p313 = por %p311, %p312
      %s315 = sadd.s32 %s314, 1
      %p318 = scmp.eq.s32.totalorder %s34, 3
      %p319 = scmp.ne.s32.totalorder %s314, %s316
      %p320 = scmp.eq.s32.totalorder %s34, 0
      %p321 = por %p319, %p320
      %p322 = scmp.ne.s32.totalorder %s314, %s316
      %p323 = scmp.eq.s32.totalorder %s39, 3
      %p324 = por %p322, %p323
      %p325 = scmp.ne.s32.totalorder %s316, %s317
      %p326 = scmp.eq.s32.totalorder %s39, 0
      %p327 = por %p325, %p326
      %p328 = scmp.ne.s32.totalorder %s316, %s317
      %p329 = scmp.eq.s32.totalorder %s40, 3
      %p330 = por %p328, %p329
      %p332 = scmp.ne.s32.totalorder %s317, %s331
      %p333 = scmp.eq.s32.totalorder %s40, 0
      %p334 = por %p332, %p333
      %s336 = sadd.s32 %s335, 1
      %p339 = scmp.eq.s32.totalorder %s34, 3
      %p340 = scmp.ne.s32.totalorder %s335, %s337
      %p341 = scmp.eq.s32.totalorder %s34, 0
      %p342 = por %p340, %p341
      %p343 = scmp.ne.s32.totalorder %s335, %s337
      %p344 = scmp.eq.s32.totalorder %s39, 3
      %p345 = por %p343, %p344
      %p346 = scmp.ne.s32.totalorder %s337, %s338
      %p347 = scmp.eq.s32.totalorder %s39, 0
      %p348 = por %p346, %p347
      %p349 = scmp.ne.s32.totalorder %s337, %s338
      %p350 = scmp.eq.s32.totalorder %s40, 3
      %p351 = por %p349, %p350
      %p353 = scmp.ne.s32.totalorder %s338, %s352
      %p354 = scmp.eq.s32.totalorder %s40, 0
      %p355 = por %p353, %p354
      %s357 = sadd.s32 %s356, 1
      %p360 = scmp.eq.s32.totalorder %s34, 3
      %p361 = scmp.ne.s32.totalorder %s356, %s358
      %p362 = scmp.eq.s32.totalorder %s34, 0
      %p363 = por %p361, %p362
      %p364 = scmp.ne.s32.totalorder %s356, %s358
      %p365 = scmp.eq.s32.totalorder %s39, 3
      %p366 = por %p364, %p365
      %p367 = scmp.ne.s32.totalorder %s358, %s359
      %p368 = scmp.eq.s32.totalorder %s39, 0
      %p369 = por %p367, %p368
      %p370 = scmp.ne.s32.totalorder %s358, %s359
      %p371 = scmp.eq.s32.totalorder %s40, 3
      %p372 = por %p370, %p371
      %p374 = scmp.ne.s32.totalorder %s359, %s373
      %p375 = scmp.eq.s32.totalorder %s40, 0
      %p376 = por %p374, %p375
      %s378 = sadd.s32 %s377, 1
      %p381 = scmp.eq.s32.totalorder %s34, 3
      %p382 = scmp.ne.s32.totalorder %s377, %s379
      %p383 = scmp.eq.s32.totalorder %s34, 0
      %p384 = por %p382, %p383
      %p385 = scmp.ne.s32.totalorder %s377, %s379
      %p386 = scmp.eq.s32.totalorder %s39, 3
      %p387 = por %p385, %p386
      %p388 = scmp.ne.s32.totalorder %s379, %s380
      %p389 = scmp.eq.s32.totalorder %s39, 0
      %p390 = por %p388, %p389
      %p391 = scmp.ne.s32.totalorder %s379, %s380
      %p392 = scmp.eq.s32.totalorder %s40, 3
      %p393 = por %p391, %p392
      %p395 = scmp.ne.s32.totalorder %s380, %s394
      %p396 = scmp.eq.s32.totalorder %s40, 0
      %p397 = por %p395, %p396
      %s399 = sadd.s32 %s398, 1
      %p402 = scmp.eq.s32.totalorder %s34, 3
      %p403 = scmp.ne.s32.totalorder %s398, %s400
      %p404 = scmp.eq.s32.totalorder %s34, 0
      %p405 = por %p403, %p404
      %p406 = scmp.ne.s32.totalorder %s398, %s400
      %p407 = scmp.eq.s32.totalorder %s39, 3
      %p408 = por %p406, %p407
      %p409 = scmp.ne.s32.totalorder %s400, %s401
      %p410 = scmp.eq.s32.totalorder %s39, 0
      %p411 = por %p409, %p410
      %p412 = scmp.ne.s32.totalorder %s400, %s401
      %p413 = scmp.eq.s32.totalorder %s40, 3
      %p414 = por %p412, %p413
      %p416 = scmp.ne.s32.totalorder %s401, %s415
      %p417 = scmp.eq.s32.totalorder %s40, 0
      %p418 = por %p416, %p417
      %s420 = sadd.s32 %s419, 1
      %p423 = scmp.eq.s32.totalorder %s34, 3
      %p424 = scmp.ne.s32.totalorder %s419, %s421
      %p425 = scmp.eq.s32.totalorder %s34, 0
      %p426 = por %p424, %p425
      %p427 = scmp.ne.s32.totalorder %s419, %s421
      %p428 = scmp.eq.s32.totalorder %s39, 3
      %p429 = por %p427, %p428
      %p430 = scmp.ne.s32.totalorder %s421, %s422
      %p431 = scmp.eq.s32.totalorder %s39, 0
      %p432 = por %p430, %p431
      %p433 = scmp.ne.s32.totalorder %s421, %s422
      %p434 = scmp.eq.s32.totalorder %s40, 3
      %p435 = por %p433, %p434
      %p437 = scmp.ne.s32.totalorder %s422, %s436
      %p438 = scmp.eq.s32.totalorder %s40, 0
      %p439 = por %p437, %p438
      %s441 = sadd.s32 %s440, 1
      %p444 = scmp.eq.s32.totalorder %s34, 3
      %p445 = scmp.ne.s32.totalorder %s440, %s442
      %p446 = scmp.eq.s32.totalorder %s34, 0
      %p447 = por %p445, %p446
      %p448 = scmp.ne.s32.totalorder %s440, %s442
      %p449 = scmp.eq.s32.totalorder %s39, 3
      %p450 = por %p448, %p449
      %p451 = scmp.ne.s32.totalorder %s442, %s443
      %p452 = scmp.eq.s32.totalorder %s39, 0
      %p453 = por %p451, %p452
      %p454 = scmp.ne.s32.totalorder %s442, %s443
      %p455 = scmp.eq.s32.totalorder %s40, 3
      %p456 = por %p454, %p455
      %p458 = scmp.ne.s32.totalorder %s443, %s457
      %p459 = scmp.eq.s32.totalorder %s40, 0
      %p460 = por %p458, %p459
      %s461 = ssub.s32 %s34, %s41
      %p462 = scmp.eq.s32.totalorder %s461, 0
      %s464 = sadd.s32 %s463, 1
      %s465 = scalar_select %p462, %s463, %s464
      %p468 = pneg %p462
      %p469 = scmp.eq.s32.totalorder %s34, 3
      %p470 = por %p468, %p469
      %p471 = scmp.ne.s32.totalorder %s463, %s466
      %p472 = scmp.eq.s32.totalorder %s34, 0
      %p473 = por %p471, %p472
      %p474 = scmp.ne.s32.totalorder %s463, %s466
      %p475 = scmp.eq.s32.totalorder %s39, 3
      %p476 = por %p474, %p475
      %p477 = scmp.ne.s32.totalorder %s466, %s467
      %p478 = scmp.eq.s32.totalorder %s39, 0
      %p479 = por %p477, %p478
      %p480 = scmp.ne.s32.totalorder %s466, %s467
      %p481 = scmp.eq.s32.totalorder %s40, 3
      %p482 = por %p480, %p481
      %p484 = scmp.ne.s32.totalorder %s467, %s483
      %p485 = scmp.eq.s32.totalorder %s40, 0
      %p486 = por %p484, %p485
      %s488 = sadd.s32 %s487, 1
      %p491 = scmp.eq.s32.totalorder %s34, 3
      %p492 = scmp.ne.s32.totalorder %s487, %s489
      %p493 = scmp.eq.s32.totalorder %s34, 0
      %p494 = por %p492, %p493
      %p495 = scmp.ne.s32.totalorder %s487, %s489
      %p496 = scmp.eq.s32.totalorder %s39, 3
      %p497 = por %p495, %p496
      %p498 = scmp.ne.s32.totalorder %s489, %s490
      %p499 = scmp.eq.s32.totalorder %s39, 0
      %p500 = por %p498, %p499
      %p501 = scmp.ne.s32.totalorder %s489, %s490
      %p502 = scmp.eq.s32.totalorder %s40, 3
      %p503 = por %p501, %p502
      %p505 = scmp.ne.s32.totalorder %s490, %s504
      %p506 = scmp.eq.s32.totalorder %s40, 0
      %p507 = por %p505, %p506
      %s509 = sadd.s32 %s508, 1
      %p512 = scmp.eq.s32.totalorder %s34, 3
      %p513 = scmp.ne.s32.totalorder %s508, %s510
      %p514 = scmp.eq.s32.totalorder %s34, 0
      %p515 = por %p513, %p514
      %p516 = scmp.ne.s32.totalorder %s508, %s510
      %p517 = scmp.eq.s32.totalorder %s39, 3
      %p518 = por %p516, %p517
      %p519 = scmp.ne.s32.totalorder %s510, %s511
      %p520 = scmp.eq.s32.totalorder %s39, 0
      %p521 = por %p519, %p520
      %p522 = scmp.ne.s32.totalorder %s510, %s511
      %p523 = scmp.eq.s32.totalorder %s40, 3
      %p524 = por %p522, %p523
      %p526 = scmp.ne.s32.totalorder %s511, %s525
      %p527 = scmp.eq.s32.totalorder %s40, 0
      %p528 = por %p526, %p527
      %s530 = sadd.s32 %s529, 1
      %p533 = scmp.eq.s32.totalorder %s34, 3
      %p534 = scmp.ne.s32.totalorder %s529, %s531
      %p535 = scmp.eq.s32.totalorder %s34, 0
      %p536 = por %p534, %p535
      %p537 = scmp.ne.s32.totalorder %s529, %s531
      %p538 = scmp.eq.s32.totalorder %s39, 3
      %p539 = por %p537, %p538
      %p540 = scmp.ne.s32.totalorder %s531, %s532
      %p541 = scmp.eq.s32.totalorder %s39, 0
      %p542 = por %p540, %p541
      %p543 = scmp.ne.s32.totalorder %s531, %s532
      %p544 = scmp.eq.s32.totalorder %s40, 3
      %p545 = por %p543, %p544
      %p547 = scmp.ne.s32.totalorder %s532, %s546
      %p548 = scmp.eq.s32.totalorder %s40, 0
      %p549 = por %p547, %p548
      %s551 = sadd.s32 %s550, 1
      %p554 = scmp.eq.s32.totalorder %s34, 3
      %p555 = scmp.ne.s32.totalorder %s550, %s552
      %p556 = scmp.eq.s32.totalorder %s34, 0
      %p557 = por %p555, %p556
      %p558 = scmp.ne.s32.totalorder %s550, %s552
      %p559 = scmp.eq.s32.totalorder %s39, 3
      %p560 = por %p558, %p559
      %p561 = scmp.ne.s32.totalorder %s552, %s553
      %p562 = scmp.eq.s32.totalorder %s39, 0
      %p563 = por %p561, %p562
      %p564 = scmp.ne.s32.totalorder %s552, %s553
      %p565 = scmp.eq.s32.totalorder %s40, 3
      %p566 = por %p564, %p565
      %p568 = scmp.ne.s32.totalorder %s553, %s567
      %p569 = scmp.eq.s32.totalorder %s40, 0
      %p570 = por %p568, %p569
      %s572 = sadd.s32 %s571, 1
      %p575 = scmp.eq.s32.totalorder %s34, 3
      %p576 = scmp.ne.s32.totalorder %s571, %s573
      %p577 = scmp.eq.s32.totalorder %s34, 0
      %p578 = por %p576, %p577
      %p579 = scmp.ne.s32.totalorder %s571, %s573
      %p580 = scmp.eq.s32.totalorder %s39, 3
      %p581 = por %p579, %p580
      %p582 = scmp.ne.s32.totalorder %s573, %s574
      %p583 = scmp.eq.s32.totalorder %s39, 0
      %p584 = por %p582, %p583
      %p585 = scmp.ne.s32.totalorder %s573, %s574
      %p586 = scmp.eq.s32.totalorder %s40, 3
      %p587 = por %p585, %p586
      %p589 = scmp.ne.s32.totalorder %s574, %s588
      %p590 = scmp.eq.s32.totalorder %s40, 0
      %p591 = por %p589, %p590
      %p592 = scmp.le.s32.totalorder 1, %s34
      %p593 = scmp.lt.s32.totalorder %s34, 5
      %p594 = pnand %p592, %p593
      %p595 = pneg %p594
      // Predicated region
      $region9: #{adamoco_forward.1} parent=5 // pred_check
        _
      $region10: #{adamoco_forward.1} parent=5 // pred_check_branch
        %597 = sbr.rel (%p594) target = $region12
      $region11: #{adamoco_forward.1} parent=5 // pred_region
        %s598 = ssub.s32 %s34, 1
        // Predicated region
        $region13: #{adamoco_forward.1} parent=11 // pred_check
          %p599 = pneg %p133
        $region14: #{adamoco_forward.1} parent=11 // pred_check_branch
          %601 = sbr.rel (%p599) target = $region16
        $region15: #{adamoco_forward.1} parent=11 // pred_region
          _
        $region16: #{adamoco_forward.1} parent=11 // pred_fallthru
          _
        // Predicated region
        $region17: #{adamoco_forward.1} parent=11 // pred_check
          %p602 = pneg %p154
        $region18: #{adamoco_forward.1} parent=11 // pred_check_branch
          %604 = sbr.rel (%p602) target = $region20
        $region19: #{adamoco_forward.1} parent=11 // pred_region
          _
        $region20: #{adamoco_forward.1} parent=11 // pred_fallthru
          _
        // Predicated region
        $region21: #{adamoco_forward.1} parent=11 // pred_check
          %p605 = pneg %p175
        $region22: #{adamoco_forward.1} parent=11 // pred_check_branch
          %607 = sbr.rel (%p605) target = $region24
        $region23: #{adamoco_forward.1} parent=11 // pred_region
          _
        $region24: #{adamoco_forward.1} parent=11 // pred_fallthru
          _
        // Predicated region
        $region25: #{adamoco_forward.1} parent=11 // pred_check
          %p608 = pneg %p196
        $region26: #{adamoco_forward.1} parent=11 // pred_check_branch
          %610 = sbr.rel (%p608) target = $region28
        $region27: #{adamoco_forward.1} parent=11 // pred_region
          _
        $region28: #{adamoco_forward.1} parent=11 // pred_fallthru
          _
        // Predicated region
        $region29: #{adamoco_forward.1} parent=11 // pred_check
          %p611 = pneg %p217
        $region30: #{adamoco_forward.1} parent=11 // pred_check_branch
          %613 = sbr.rel (%p611) target = $region32
        $region31: #{adamoco_forward.1} parent=11 // pred_region
          _
        $region32: #{adamoco_forward.1} parent=11 // pred_fallthru
          _
        // Predicated region
        $region33: #{adamoco_forward.1} parent=11 // pred_check
          %p614 = pneg %p264
        $region34: #{adamoco_forward.1} parent=11 // pred_check_branch
          %616 = sbr.rel (%p614) target = $region36
        $region35: #{adamoco_forward.1} parent=11 // pred_region
          _
        $region36: #{adamoco_forward.1} parent=11 // pred_fallthru
          _
        // Predicated region
        $region37: #{adamoco_forward.1} parent=11 // pred_check
          %p617 = pneg %p285
        $region38: #{adamoco_forward.1} parent=11 // pred_check_branch
          %619 = sbr.rel (%p617) target = $region40
        $region39: #{adamoco_forward.1} parent=11 // pred_region
          _
        $region40: #{adamoco_forward.1} parent=11 // pred_fallthru
          _
        // Predicated region
        $region41: #{adamoco_forward.1} parent=11 // pred_check
          %p620 = pneg %p306
        $region42: #{adamoco_forward.1} parent=11 // pred_check_branch
          %622 = sbr.rel (%p620) target = $region44
        $region43: #{adamoco_forward.1} parent=11 // pred_region
          _
        $region44: #{adamoco_forward.1} parent=11 // pred_fallthru
          _
        // Predicated region
        $region45: #{adamoco_forward.1} parent=11 // pred_check
          %p623 = pneg %p327
        $region46: #{adamoco_forward.1} parent=11 // pred_check_branch
          %625 = sbr.rel (%p623) target = $region48
        $region47: #{adamoco_forward.1} parent=11 // pred_region
          _
        $region48: #{adamoco_forward.1} parent=11 // pred_fallthru
          _
        // Predicated region
        $region49: #{adamoco_forward.1} parent=11 // pred_check
          %p626 = pneg %p348
        $region50: #{adamoco_forward.1} parent=11 // pred_check_branch
          %628 = sbr.rel (%p626) target = $region52
        $region51: #{adamoco_forward.1} parent=11 // pred_region
          _
        $region52: #{adamoco_forward.1} parent=11 // pred_fallthru
          _
        // Predicated region
        $region53: #{adamoco_forward.1} parent=11 // pred_check
          %p629 = pneg %p369
        $region54: #{adamoco_forward.1} parent=11 // pred_check_branch
          %631 = sbr.rel (%p629) target = $region56
        $region55: #{adamoco_forward.1} parent=11 // pred_region
          _
        $region56: #{adamoco_forward.1} parent=11 // pred_fallthru
          _
      $region12: #{adamoco_forward.1} parent=5 // pred_fallthru
        _
      %p632 = scmp.lt.s32.totalorder %s34, 4
      // Predicated region
      $region57: #{adamoco_forward.1} parent=5 // pred_check
        %p633 = pneg %p632
      $region58: #{adamoco_forward.1} parent=5 // pred_check_branch
        %635 = sbr.rel (%p633) target = $region60
      $region59: #{adamoco_forward.1} parent=5 // pred_region
        // Predicated region
        $region61: #{adamoco_forward.1} parent=59 // pred_check
          %p636 = pneg %p54
        $region62: #{adamoco_forward.1} parent=59 // pred_check_branch
          %638 = sbr.rel (%p636) target = $region64
        $region63: #{adamoco_forward.1} parent=59 // pred_region
          %s639 = smul.u32 2, %s34
          %p640 = scmp.lt.s32.totalorder %s639, 7
          %s641 = scalar_select %p640, %s639, 7
          %s642 = scalar_lea.vmem %s0, %s641
          %s643 = smul.u32 2, %s34
        $region64: #{adamoco_forward.1} parent=59 // pred_fallthru
          _
        // Predicated region
        $region65: #{adamoco_forward.1} parent=59 // pred_check
          %p644 = pneg %p80
        $region66: #{adamoco_forward.1} parent=59 // pred_check_branch
          %646 = sbr.rel (%p644) target = $region68
        $region67: #{adamoco_forward.1} parent=59 // pred_region
          %s647 = smul.u32 2, %s34
          %p648 = scmp.lt.s32.totalorder %s647, 7
          %s649 = scalar_select %p648, %s647, 7
          %s650 = scalar_lea.vmem %s1, %s649
          %s651 = smul.u32 2, %s34
        $region68: #{adamoco_forward.1} parent=59 // pred_fallthru
          _
        // Predicated region
        $region69: #{adamoco_forward.1} parent=59 // pred_check
          %p652 = pneg %p106
        $region70: #{adamoco_forward.1} parent=59 // pred_check_branch
          %654 = sbr.rel (%p652) target = $region72
        $region71: #{adamoco_forward.1} parent=59 // pred_region
          %s655 = smul.u32 32, %s34
          %p656 = scmp.lt.s32.totalorder %s655, 127
          %s657 = scalar_select %p656, %s655, 127
          %s658 = smul.addr %s657, 2
          %s659 = smul.addr %s658, 8
          %s660 = scalar_lea.vmem %s2, %s659
          %s661 = smul.u32 32, %s34
        $region72: #{adamoco_forward.1} parent=59 // pred_fallthru
          _
        // Predicated region
        $region73: #{adamoco_forward.1} parent=59 // pred_check
          %p662 = pneg %p237
        $region74: #{adamoco_forward.1} parent=59 // pred_check_branch
          %664 = sbr.rel (%p662) target = $region76
        $region75: #{adamoco_forward.1} parent=59 // pred_region
          %s665 = smul.u32 32, %s34
          %p666 = scmp.lt.s32.totalorder %s665, 127
          %s667 = scalar_select %p666, %s665, 127
          %s668 = smul.addr %s667, 2
          %s669 = smul.addr %s668, 8
          %s670 = scalar_lea.vmem %s8, %s669
          %s671 = smul.u32 32, %s34
        $region76: #{adamoco_forward.1} parent=59 // pred_fallthru
          _
      $region60: #{adamoco_forward.1} parent=5 // pred_fallthru
        _
      %p672 = scmp.le.s32.totalorder 1, %s34
      %p673 = scmp.lt.s32.totalorder %s34, 5
      %p674 = pnand %p672, %p673
      %p675 = pneg %p674
      // Predicated region
      $region77: #{adamoco_forward.1} parent=5 // pred_check
        _
      $region78: #{adamoco_forward.1} parent=5 // pred_check_branch
        %677 = sbr.rel (%p674) target = $region80
      $region79: #{adamoco_forward.1} parent=5 // pred_region
        %s678 = ssub.s32 %s34, 1
        %s679 = smul.u32 2, %s39
        %p680 = scmp.lt.s32.totalorder %s679, 7
        %s681 = scalar_select %p680, %s679, 7
        %s682 = scalar_lea.vmem %s0, %s681
        %p683 = pneg %p60
        %p684 = pneg %p57
        %s685 = smul.u32 2, %s39
        %p686 = scmp.lt.s32.totalorder %s685, 7
        %s687 = scalar_select %p686, %s685, 7
        %s688 = scalar_lea.vmem %s1, %s687
        %p689 = pneg %p86
        %p690 = pneg %p83
        %s691 = smul.u32 32, %s39
        %p692 = scmp.lt.s32.totalorder %s691, 127
        %s693 = scalar_select %p692, %s691, 127
        %s694 = smul.addr %s693, 2
        %s695 = smul.addr %s694, 8
        %s696 = scalar_lea.vmem %s2, %s695
        %p697 = pneg %p112
        %p698 = pneg %p109
        %p699 = pneg %p133
        %p700 = pneg %p130
        %p701 = pneg %p154
        %p702 = pneg %p151
        %p703 = pneg %p175
        %p704 = pneg %p172
        %p705 = pneg %p196
        %p706 = pneg %p193
        %p707 = pneg %p217
        %p708 = pneg %p214
        %s709 = smul.u32 32, %s39
        %p710 = scmp.lt.s32.totalorder %s709, 127
        %s711 = scalar_select %p710, %s709, 127
        %s712 = smul.addr %s711, 2
        %s713 = smul.addr %s712, 8
        %s714 = scalar_lea.vmem %s8, %s713
        %p715 = pneg %p243
        %p716 = pneg %p240
        %p717 = pneg %p264
        %p718 = pneg %p261
        %p719 = pneg %p285
        %p720 = pneg %p282
        %p721 = pneg %p306
        %p722 = pneg %p303
        %p723 = pneg %p327
        %p724 = pneg %p324
        %p725 = pneg %p348
        %p726 = pneg %p345
        %p727 = pneg %p369
        %p728 = pneg %p366
        %p729 = pneg %p390
        %p730 = pneg %p387
        %p731 = pneg %p411
        %p732 = pneg %p408
        %p733 = pneg %p432
        %p734 = pneg %p429
        %p735 = pneg %p453
        %p736 = pneg %p450
        %p737 = pneg %p479
        %p738 = pneg %p476
        %s739 = smul.u32 32, %s39
        %p740 = scmp.lt.s32.totalorder %s739, 127
        %s741 = scalar_select %p740, %s739, 127
        %s742 = smul.addr %s741, 2
        %s743 = smul.addr %s742, 8
        %s744 = scalar_lea.vmem %s19, %s743
        %p745 = pneg %p500
        %p746 = pneg %p497
        %p747 = pneg %p521
        %p748 = pneg %p518
        %p749 = pneg %p542
        %p750 = pneg %p539
        %p751 = pneg %p563
        %p752 = pneg %p560
        %p753 = pneg %p584
        %p754 = pneg %p581
        %s755 = smul.u32 2, %s39
        %p756 = scmp.lt.s32.totalorder %s755, 7
        %s757 = scalar_select %p756, %s755, 7
        %s758 = scalar_lea.vmem %s0, %s757
        %s759 = smul.u32 2, %s39
        %s760 = smul.u32 2, %s39
        %p761 = scmp.lt.s32.totalorder %s760, 7
        %s762 = scalar_select %p761, %s760, 7
        %s763 = scalar_lea.vmem %s1, %s762
        %s764 = smul.u32 2, %s39
        %s765 = smul.u32 32, %s39
        %p766 = scmp.lt.s32.totalorder %s765, 127
        %s767 = scalar_select %p766, %s765, 127
        %s768 = smul.addr %s767, 2
        %s769 = smul.addr %s768, 8
        %s770 = scalar_lea.vmem %s2, %s769
        %s771 = smul.u32 32, %s39
        %s772 = smul.u32 32, %s39
        %p773 = scmp.lt.s32.totalorder %s772, 127
        %s774 = scalar_select %p773, %s772, 127
        %s775 = smul.addr %s774, 2
        %s776 = smul.addr %s775, 8
        %s777 = scalar_lea.vmem %s8, %s776
        %s778 = smul.u32 32, %s39
        %s779 = smul.u32 32, %s39
        %p780 = scmp.lt.s32.totalorder %s779, 127
        %s781 = scalar_select %p780, %s779, 127
        %s782 = smul.addr %s781, 2
        %s783 = smul.addr %s782, 8
        %s784 = scalar_lea.vmem %s19, %s783
        %s785 = smul.u32 32, %s39
        %v787 = vld [vmem:[%s770] sm:$0xff]
        %v788 = vld [vmem:[%s770 + $0x8] sm:$0xff]
        %v789 = vld [vmem:[%s770 + $0x10] sm:$0xff]
        %v790 = vld [vmem:[%s770 + $0x18] sm:$0xff]
        %v791 = vld [vmem:[%s770 + $0x20] sm:$0xff]
        %v792 = vld [vmem:[%s770 + $0x28] sm:$0xff]
        %v793 = vld [vmem:[%s770 + $0x30] sm:$0xff]
        %v794 = vld [vmem:[%s770 + $0x38] sm:$0xff]
        %v795 = vld [vmem:[%s770 + $0x40] sm:$0xff]
        %v796 = vld [vmem:[%s770 + $0x48] sm:$0xff]
        %v797 = vld [vmem:[%s770 + $0x50] sm:$0xff]
        %v798 = vld [vmem:[%s770 + $0x58] sm:$0xff]
        %v799 = vld [vmem:[%s770 + $0x60] sm:$0xff]
        %v800 = vld [vmem:[%s770 + $0x68] sm:$0xff]
        %v801 = vld [vmem:[%s770 + $0x70] sm:$0xff]
        %v802 = vld [vmem:[%s770 + $0x78] sm:$0xff]
        %v803 = vld [vmem:[%s770 + $0x80] sm:$0xff]
        %v804 = vld [vmem:[%s770 + $0x88] sm:$0xff]
        %v805 = vld [vmem:[%s770 + $0x90] sm:$0xff]
        %v806 = vld [vmem:[%s770 + $0x98] sm:$0xff]
        %v807 = vld [vmem:[%s770 + $0xa0] sm:$0xff]
        %v808 = vld [vmem:[%s770 + $0xa8] sm:$0xff]
        %v809 = vld [vmem:[%s770 + $0xb0] sm:$0xff]
        %v810 = vld [vmem:[%s770 + $0xb8] sm:$0xff]
        %v811 = vld [vmem:[%s770 + $0xc0] sm:$0xff]
        %v812 = vld [vmem:[%s770 + $0xc8] sm:$0xff]
        %v813 = vld [vmem:[%s770 + $0xd0] sm:$0xff]
        %v814 = vld [vmem:[%s770 + $0xd8] sm:$0xff]
        %v815 = vld [vmem:[%s770 + $0xe0] sm:$0xff]
        %v816 = vld [vmem:[%s770 + $0xe8] sm:$0xff]
        %v817 = vld [vmem:[%s770 + $0xf0] sm:$0xff]
        %v818 = vld [vmem:[%s770 + $0xf8] sm:$0xff]
        %v819 = vld [vmem:[%s770 + $0x100] sm:$0xff]
        %v820 = vld [vmem:[%s770 + $0x108] sm:$0xff]
        %v821 = vld [vmem:[%s770 + $0x110] sm:$0xff]
        %v822 = vld [vmem:[%s770 + $0x118] sm:$0xff]
        %v823 = vld [vmem:[%s770 + $0x120] sm:$0xff]
        %v824 = vld [vmem:[%s770 + $0x128] sm:$0xff]
        %v825 = vld [vmem:[%s770 + $0x130] sm:$0xff]
        %v826 = vld [vmem:[%s770 + $0x138] sm:$0xff]
        %v827 = vld [vmem:[%s770 + $0x140] sm:$0xff]
        %v828 = vld [vmem:[%s770 + $0x148] sm:$0xff]
        %v829 = vld [vmem:[%s770 + $0x150] sm:$0xff]
        %v830 = vld [vmem:[%s770 + $0x158] sm:$0xff]
        %v831 = vld [vmem:[%s770 + $0x160] sm:$0xff]
        %v832 = vld [vmem:[%s770 + $0x168] sm:$0xff]
        %v833 = vld [vmem:[%s770 + $0x170] sm:$0xff]
        %v834 = vld [vmem:[%s770 + $0x178] sm:$0xff]
        %v835 = vld [vmem:[%s770 + $0x180] sm:$0xff]
        %v836 = vld [vmem:[%s770 + $0x188] sm:$0xff]
        %v837 = vld [vmem:[%s770 + $0x190] sm:$0xff]
        %v838 = vld [vmem:[%s770 + $0x198] sm:$0xff]
        %v839 = vld [vmem:[%s770 + $0x1a0] sm:$0xff]
        %v840 = vld [vmem:[%s770 + $0x1a8] sm:$0xff]
        %v841 = vld [vmem:[%s770 + $0x1b0] sm:$0xff]
        %v842 = vld [vmem:[%s770 + $0x1b8] sm:$0xff]
        %v843 = vld [vmem:[%s770 + $0x1c0] sm:$0xff]
        %v844 = vld [vmem:[%s770 + $0x1c8] sm:$0xff]
        %v845 = vld [vmem:[%s770 + $0x1d0] sm:$0xff]
        %v846 = vld [vmem:[%s770 + $0x1d8] sm:$0xff]
        %v847 = vld [vmem:[%s770 + $0x1e0] sm:$0xff]
        %v848 = vld [vmem:[%s770 + $0x1e8] sm:$0xff]
        %v849 = vld [vmem:[%s770 + $0x1f0] sm:$0xff]
        %v850 = vld [vmem:[%s770 + $0x1f8] sm:$0xff]
        %v851 = vld [vmem:[%s777] sm:$0xff]
        %v852 = vld [vmem:[%s777 + $0x8] sm:$0xff]
        %v853 = vld [vmem:[%s777 + $0x10] sm:$0xff]
        %v854 = vld [vmem:[%s777 + $0x18] sm:$0xff]
        %v855 = vld [vmem:[%s777 + $0x20] sm:$0xff]
        %v856 = vld [vmem:[%s777 + $0x28] sm:$0xff]
        %v857 = vld [vmem:[%s777 + $0x30] sm:$0xff]
        %v858 = vld [vmem:[%s777 + $0x38] sm:$0xff]
        %v859 = vld [vmem:[%s777 + $0x40] sm:$0xff]
        %v860 = vld [vmem:[%s777 + $0x48] sm:$0xff]
        %v861 = vld [vmem:[%s777 + $0x50] sm:$0xff]
        %v862 = vld [vmem:[%s777 + $0x58] sm:$0xff]
        %v863 = vld [vmem:[%s777 + $0x60] sm:$0xff]
        %v864 = vld [vmem:[%s777 + $0x68] sm:$0xff]
        %v865 = vld [vmem:[%s777 + $0x70] sm:$0xff]
        %v866 = vld [vmem:[%s777 + $0x78] sm:$0xff]
        %v867 = vld [vmem:[%s777 + $0x80] sm:$0xff]
        %v868 = vld [vmem:[%s777 + $0x88] sm:$0xff]
        %v869 = vld [vmem:[%s777 + $0x90] sm:$0xff]
        %v870 = vld [vmem:[%s777 + $0x98] sm:$0xff]
        %v871 = vld [vmem:[%s777 + $0xa0] sm:$0xff]
        %v872 = vld [vmem:[%s777 + $0xa8] sm:$0xff]
        %v873 = vld [vmem:[%s777 + $0xb0] sm:$0xff]
        %v874 = vld [vmem:[%s777 + $0xb8] sm:$0xff]
        %v875 = vld [vmem:[%s777 + $0xc0] sm:$0xff]
        %v876 = vld [vmem:[%s777 + $0xc8] sm:$0xff]
        %v877 = vld [vmem:[%s777 + $0xd0] sm:$0xff]
        %v878 = vld [vmem:[%s777 + $0xd8] sm:$0xff]
        %v879 = vld [vmem:[%s777 + $0xe0] sm:$0xff]
        %v880 = vld [vmem:[%s777 + $0xe8] sm:$0xff]
        %v881 = vld [vmem:[%s777 + $0xf0] sm:$0xff]
        %v882 = vld [vmem:[%s777 + $0xf8] sm:$0xff]
        %v883 = vld [vmem:[%s777 + $0x100] sm:$0xff]
        %v884 = vld [vmem:[%s777 + $0x108] sm:$0xff]
        %v885 = vld [vmem:[%s777 + $0x110] sm:$0xff]
        %v886 = vld [vmem:[%s777 + $0x118] sm:$0xff]
        %v887 = vld [vmem:[%s777 + $0x120] sm:$0xff]
        %v888 = vld [vmem:[%s777 + $0x128] sm:$0xff]
        %v889 = vld [vmem:[%s777 + $0x130] sm:$0xff]
        %v890 = vld [vmem:[%s777 + $0x138] sm:$0xff]
        %v891 = vld [vmem:[%s777 + $0x140] sm:$0xff]
        %v892 = vld [vmem:[%s777 + $0x148] sm:$0xff]
        %v893 = vld [vmem:[%s777 + $0x150] sm:$0xff]
        %v894 = vld [vmem:[%s777 + $0x158] sm:$0xff]
        %v895 = vld [vmem:[%s777 + $0x160] sm:$0xff]
        %v896 = vld [vmem:[%s777 + $0x168] sm:$0xff]
        %v897 = vld [vmem:[%s777 + $0x170] sm:$0xff]
        %v898 = vld [vmem:[%s777 + $0x178] sm:$0xff]
        %v899 = vld [vmem:[%s777 + $0x180] sm:$0xff]
        %v900 = vld [vmem:[%s777 + $0x188] sm:$0xff]
        %v901 = vld [vmem:[%s777 + $0x190] sm:$0xff]
        %v902 = vld [vmem:[%s777 + $0x198] sm:$0xff]
        %v903 = vld [vmem:[%s777 + $0x1a0] sm:$0xff]
        %v904 = vld [vmem:[%s777 + $0x1a8] sm:$0xff]
        %v905 = vld [vmem:[%s777 + $0x1b0] sm:$0xff]
        %v906 = vld [vmem:[%s777 + $0x1b8] sm:$0xff]
        %v907 = vld [vmem:[%s777 + $0x1c0] sm:$0xff]
        %v908 = vld [vmem:[%s777 + $0x1c8] sm:$0xff]
        %v909 = vld [vmem:[%s777 + $0x1d0] sm:$0xff]
        %v910 = vld [vmem:[%s777 + $0x1d8] sm:$0xff]
        %v911 = vld [vmem:[%s777 + $0x1e0] sm:$0xff]
        %v912 = vld [vmem:[%s777 + $0x1e8] sm:$0xff]
        %v913 = vld [vmem:[%s777 + $0x1f0] sm:$0xff]
        %v914 = vld [vmem:[%s777 + $0x1f8] sm:$0xff]
        %v915 = vmul.f32 %v851, 0.999
        %v916 = vmul.f32 %v852, 0.999
        %v917 = vmul.f32 %v853, 0.999
        %v918 = vmul.f32 %v854, 0.999
        %v919 = vmul.f32 %v855, 0.999
        %v920 = vmul.f32 %v856, 0.999
        %v921 = vmul.f32 %v857, 0.999
        %v922 = vmul.f32 %v858, 0.999
        %v923 = vmul.f32 %v859, 0.999
        %v924 = vmul.f32 %v860, 0.999
        %v925 = vmul.f32 %v861, 0.999
        %v926 = vmul.f32 %v862, 0.999
        %v927 = vmul.f32 %v863, 0.999
        %v928 = vmul.f32 %v864, 0.999
        %v929 = vmul.f32 %v865, 0.999
        %v930 = vmul.f32 %v866, 0.999
        %v931 = vmul.f32 %v867, 0.999
        %v932 = vmul.f32 %v868, 0.999
        %v933 = vmul.f32 %v869, 0.999
        %v934 = vmul.f32 %v870, 0.999
        %v935 = vmul.f32 %v871, 0.999
        %v936 = vmul.f32 %v872, 0.999
        %v937 = vmul.f32 %v873, 0.999
        %v938 = vmul.f32 %v874, 0.999
        %v939 = vmul.f32 %v875, 0.999
        %v940 = vmul.f32 %v876, 0.999
        %v941 = vmul.f32 %v877, 0.999
        %v942 = vmul.f32 %v878, 0.999
        %v943 = vmul.f32 %v879, 0.999
        %v944 = vmul.f32 %v880, 0.999
        %v945 = vmul.f32 %v881, 0.999
        %v946 = vmul.f32 %v882, 0.999
        %v947 = vmul.f32 %v883, 0.999
        %v948 = vmul.f32 %v884, 0.999
        %v949 = vmul.f32 %v885, 0.999
        %v950 = vmul.f32 %v886, 0.999
        %v951 = vmul.f32 %v887, 0.999
        %v952 = vmul.f32 %v888, 0.999
        %v953 = vmul.f32 %v889, 0.999
        %v954 = vmul.f32 %v890, 0.999
        %v955 = vmul.f32 %v891, 0.999
        %v956 = vmul.f32 %v892, 0.999
        %v957 = vmul.f32 %v893, 0.999
        %v958 = vmul.f32 %v894, 0.999
        %v959 = vmul.f32 %v895, 0.999
        %v960 = vmul.f32 %v896, 0.999
        %v961 = vmul.f32 %v897, 0.999
        %v962 = vmul.f32 %v898, 0.999
        %v963 = vmul.f32 %v899, 0.999
        %v964 = vmul.f32 %v900, 0.999
        %v965 = vmul.f32 %v901, 0.999
        %v966 = vmul.f32 %v902, 0.999
        %v967 = vmul.f32 %v903, 0.999
        %v968 = vmul.f32 %v904, 0.999
        %v969 = vmul.f32 %v905, 0.999
        %v970 = vmul.f32 %v906, 0.999
        %v971 = vmul.f32 %v907, 0.999
        %v972 = vmul.f32 %v908, 0.999
        %v973 = vmul.f32 %v909, 0.999
        %v974 = vmul.f32 %v910, 0.999
        %v975 = vmul.f32 %v911, 0.999
        %v976 = vmul.f32 %v912, 0.999
        %v977 = vmul.f32 %v913, 0.999
        %v978 = vmul.f32 %v914, 0.999
        %v979 = vmul.f32 %v787, 0.001
        %v980 = vmul.f32 %v788, 0.001
        %v981 = vmul.f32 %v789, 0.001
        %v982 = vmul.f32 %v790, 0.001
        %v983 = vmul.f32 %v791, 0.001
        %v984 = vmul.f32 %v792, 0.001
        %v985 = vmul.f32 %v793, 0.001
        %v986 = vmul.f32 %v794, 0.001
        %v987 = vmul.f32 %v795, 0.001
        %v988 = vmul.f32 %v796, 0.001
        %v989 = vmul.f32 %v797, 0.001
        %v990 = vmul.f32 %v798, 0.001
        %v991 = vmul.f32 %v799, 0.001
        %v992 = vmul.f32 %v800, 0.001
        %v993 = vmul.f32 %v801, 0.001
        %v994 = vmul.f32 %v802, 0.001
        %v995 = vmul.f32 %v803, 0.001
        %v996 = vmul.f32 %v804, 0.001
        %v997 = vmul.f32 %v805, 0.001
        %v998 = vmul.f32 %v806, 0.001
        %v999 = vmul.f32 %v807, 0.001
        %v1000 = vmul.f32 %v808, 0.001
        %v1001 = vmul.f32 %v809, 0.001
        %v1002 = vmul.f32 %v810, 0.001
        %v1003 = vmul.f32 %v811, 0.001
        %v1004 = vmul.f32 %v812, 0.001
        %v1005 = vmul.f32 %v813, 0.001
        %v1006 = vmul.f32 %v814, 0.001
        %v1007 = vmul.f32 %v815, 0.001
        %v1008 = vmul.f32 %v816, 0.001
        %v1009 = vmul.f32 %v817, 0.001
        %v1010 = vmul.f32 %v818, 0.001
        %v1011 = vmul.f32 %v819, 0.001
        %v1012 = vmul.f32 %v820, 0.001
        %v1013 = vmul.f32 %v821, 0.001
        %v1014 = vmul.f32 %v822, 0.001
        %v1015 = vmul.f32 %v823, 0.001
        %v1016 = vmul.f32 %v824, 0.001
        %v1017 = vmul.f32 %v825, 0.001
        %v1018 = vmul.f32 %v826, 0.001
        %v1019 = vmul.f32 %v827, 0.001
        %v1020 = vmul.f32 %v828, 0.001
        %v1021 = vmul.f32 %v829, 0.001
        %v1022 = vmul.f32 %v830, 0.001
        %v1023 = vmul.f32 %v831, 0.001
        %v1024 = vmul.f32 %v832, 0.001
        %v1025 = vmul.f32 %v833, 0.001
        %v1026 = vmul.f32 %v834, 0.001
        %v1027 = vmul.f32 %v835, 0.001
        %v1028 = vmul.f32 %v836, 0.001
        %v1029 = vmul.f32 %v837, 0.001
        %v1030 = vmul.f32 %v838, 0.001
        %v1031 = vmul.f32 %v839, 0.001
        %v1032 = vmul.f32 %v840, 0.001
        %v1033 = vmul.f32 %v841, 0.001
        %v1034 = vmul.f32 %v842, 0.001
        %v1035 = vmul.f32 %v843, 0.001
        %v1036 = vmul.f32 %v844, 0.001
        %v1037 = vmul.f32 %v845, 0.001
        %v1038 = vmul.f32 %v846, 0.001
        %v1039 = vmul.f32 %v847, 0.001
        %v1040 = vmul.f32 %v848, 0.001
        %v1041 = vmul.f32 %v849, 0.001
        %v1042 = vmul.f32 %v850, 0.001
        %v1043 = vadd.f32 %v915, %v979
        %v1044 = vadd.f32 %v916, %v980
        %v1045 = vadd.f32 %v917, %v981
        %v1046 = vadd.f32 %v918, %v982
        %v1047 = vadd.f32 %v919, %v983
        %v1048 = vadd.f32 %v920, %v984
        %v1049 = vadd.f32 %v921, %v985
        %v1050 = vadd.f32 %v922, %v986
        %v1051 = vadd.f32 %v923, %v987
        %v1052 = vadd.f32 %v924, %v988
        %v1053 = vadd.f32 %v925, %v989
        %v1054 = vadd.f32 %v926, %v990
        %v1055 = vadd.f32 %v927, %v991
        %v1056 = vadd.f32 %v928, %v992
        %v1057 = vadd.f32 %v929, %v993
        %v1058 = vadd.f32 %v930, %v994
        %v1059 = vadd.f32 %v931, %v995
        %v1060 = vadd.f32 %v932, %v996
        %v1061 = vadd.f32 %v933, %v997
        %v1062 = vadd.f32 %v934, %v998
        %v1063 = vadd.f32 %v935, %v999
        %v1064 = vadd.f32 %v936, %v1000
        %v1065 = vadd.f32 %v937, %v1001
        %v1066 = vadd.f32 %v938, %v1002
        %v1067 = vadd.f32 %v939, %v1003
        %v1068 = vadd.f32 %v940, %v1004
        %v1069 = vadd.f32 %v941, %v1005
        %v1070 = vadd.f32 %v942, %v1006
        %v1071 = vadd.f32 %v943, %v1007
        %v1072 = vadd.f32 %v944, %v1008
        %v1073 = vadd.f32 %v945, %v1009
        %v1074 = vadd.f32 %v946, %v1010
        %v1075 = vadd.f32 %v947, %v1011
        %v1076 = vadd.f32 %v948, %v1012
        %v1077 = vadd.f32 %v949, %v1013
        %v1078 = vadd.f32 %v950, %v1014
        %v1079 = vadd.f32 %v951, %v1015
        %v1080 = vadd.f32 %v952, %v1016
        %v1081 = vadd.f32 %v953, %v1017
        %v1082 = vadd.f32 %v954, %v1018
        %v1083 = vadd.f32 %v955, %v1019
        %v1084 = vadd.f32 %v956, %v1020
        %v1085 = vadd.f32 %v957, %v1021
        %v1086 = vadd.f32 %v958, %v1022
        %v1087 = vadd.f32 %v959, %v1023
        %v1088 = vadd.f32 %v960, %v1024
        %v1089 = vadd.f32 %v961, %v1025
        %v1090 = vadd.f32 %v962, %v1026
        %v1091 = vadd.f32 %v963, %v1027
        %v1092 = vadd.f32 %v964, %v1028
        %v1093 = vadd.f32 %v965, %v1029
        %v1094 = vadd.f32 %v966, %v1030
        %v1095 = vadd.f32 %v967, %v1031
        %v1096 = vadd.f32 %v968, %v1032
        %v1097 = vadd.f32 %v969, %v1033
        %v1098 = vadd.f32 %v970, %v1034
        %v1099 = vadd.f32 %v971, %v1035
        %v1100 = vadd.f32 %v972, %v1036
        %v1101 = vadd.f32 %v973, %v1037
        %v1102 = vadd.f32 %v974, %v1038
        %v1103 = vadd.f32 %v975, %v1039
        %v1104 = vadd.f32 %v976, %v1040
        %v1105 = vadd.f32 %v977, %v1041
        %v1106 = vadd.f32 %v978, %v1042
        %1107 = vst [vmem:[%s784] sm:$0xff] %v1043
        %1108 = vst [vmem:[%s784 + $0x8] sm:$0xff] %v1044
        %1109 = vst [vmem:[%s784 + $0x10] sm:$0xff] %v1045
        %1110 = vst [vmem:[%s784 + $0x18] sm:$0xff] %v1046
        %1111 = vst [vmem:[%s784 + $0x20] sm:$0xff] %v1047
        %1112 = vst [vmem:[%s784 + $0x28] sm:$0xff] %v1048
        %1113 = vst [vmem:[%s784 + $0x30] sm:$0xff] %v1049
        %1114 = vst [vmem:[%s784 + $0x38] sm:$0xff] %v1050
        %1115 = vst [vmem:[%s784 + $0x40] sm:$0xff] %v1051
        %1116 = vst [vmem:[%s784 + $0x48] sm:$0xff] %v1052
        %1117 = vst [vmem:[%s784 + $0x50] sm:$0xff] %v1053
        %1118 = vst [vmem:[%s784 + $0x58] sm:$0xff] %v1054
        %1119 = vst [vmem:[%s784 + $0x60] sm:$0xff] %v1055
        %1120 = vst [vmem:[%s784 + $0x68] sm:$0xff] %v1056
        %1121 = vst [vmem:[%s784 + $0x70] sm:$0xff] %v1057
        %1122 = vst [vmem:[%s784 + $0x78] sm:$0xff] %v1058
        %1123 = vst [vmem:[%s784 + $0x80] sm:$0xff] %v1059
        %1124 = vst [vmem:[%s784 + $0x88] sm:$0xff] %v1060
        %1125 = vst [vmem:[%s784 + $0x90] sm:$0xff] %v1061
        %1126 = vst [vmem:[%s784 + $0x98] sm:$0xff] %v1062
        %1127 = vst [vmem:[%s784 + $0xa0] sm:$0xff] %v1063
        %1128 = vst [vmem:[%s784 + $0xa8] sm:$0xff] %v1064
        %1129 = vst [vmem:[%s784 + $0xb0] sm:$0xff] %v1065
        %1130 = vst [vmem:[%s784 + $0xb8] sm:$0xff] %v1066
        %1131 = vst [vmem:[%s784 + $0xc0] sm:$0xff] %v1067
        %1132 = vst [vmem:[%s784 + $0xc8] sm:$0xff] %v1068
        %1133 = vst [vmem:[%s784 + $0xd0] sm:$0xff] %v1069
        %1134 = vst [vmem:[%s784 + $0xd8] sm:$0xff] %v1070
        %1135 = vst [vmem:[%s784 + $0xe0] sm:$0xff] %v1071
        %1136 = vst [vmem:[%s784 + $0xe8] sm:$0xff] %v1072
        %1137 = vst [vmem:[%s784 + $0xf0] sm:$0xff] %v1073
        %1138 = vst [vmem:[%s784 + $0xf8] sm:$0xff] %v1074
        %1139 = vst [vmem:[%s784 + $0x100] sm:$0xff] %v1075
        %1140 = vst [vmem:[%s784 + $0x108] sm:$0xff] %v1076
        %1141 = vst [vmem:[%s784 + $0x110] sm:$0xff] %v1077
        %1142 = vst [vmem:[%s784 + $0x118] sm:$0xff] %v1078
        %1143 = vst [vmem:[%s784 + $0x120] sm:$0xff] %v1079
        %1144 = vst [vmem:[%s784 + $0x128] sm:$0xff] %v1080
        %1145 = vst [vmem:[%s784 + $0x130] sm:$0xff] %v1081
        %1146 = vst [vmem:[%s784 + $0x138] sm:$0xff] %v1082
        %1147 = vst [vmem:[%s784 + $0x140] sm:$0xff] %v1083
        %1148 = vst [vmem:[%s784 + $0x148] sm:$0xff] %v1084
        %1149 = vst [vmem:[%s784 + $0x150] sm:$0xff] %v1085
        %1150 = vst [vmem:[%s784 + $0x158] sm:$0xff] %v1086
        %1151 = vst [vmem:[%s784 + $0x160] sm:$0xff] %v1087
        %1152 = vst [vmem:[%s784 + $0x168] sm:$0xff] %v1088
        %1153 = vst [vmem:[%s784 + $0x170] sm:$0xff] %v1089
        %1154 = vst [vmem:[%s784 + $0x178] sm:$0xff] %v1090
        %1155 = vst [vmem:[%s784 + $0x180] sm:$0xff] %v1091
        %1156 = vst [vmem:[%s784 + $0x188] sm:$0xff] %v1092
        %1157 = vst [vmem:[%s784 + $0x190] sm:$0xff] %v1093
        %1158 = vst [vmem:[%s784 + $0x198] sm:$0xff] %v1094
        %1159 = vst [vmem:[%s784 + $0x1a0] sm:$0xff] %v1095
        %1160 = vst [vmem:[%s784 + $0x1a8] sm:$0xff] %v1096
        %1161 = vst [vmem:[%s784 + $0x1b0] sm:$0xff] %v1097
        %1162 = vst [vmem:[%s784 + $0x1b8] sm:$0xff] %v1098
        %1163 = vst [vmem:[%s784 + $0x1c0] sm:$0xff] %v1099
        %1164 = vst [vmem:[%s784 + $0x1c8] sm:$0xff] %v1100
        %1165 = vst [vmem:[%s784 + $0x1d0] sm:$0xff] %v1101
        %1166 = vst [vmem:[%s784 + $0x1d8] sm:$0xff] %v1102
        %1167 = vst [vmem:[%s784 + $0x1e0] sm:$0xff] %v1103
        %1168 = vst [vmem:[%s784 + $0x1e8] sm:$0xff] %v1104
        %1169 = vst [vmem:[%s784 + $0x1f0] sm:$0xff] %v1105
        %1170 = vst [vmem:[%s784 + $0x1f8] sm:$0xff] %v1106
        %p1171 = scmp.eq.s32.totalorder %s39, 0
        // Predicated region
        $region81: #{adamoco_forward.1} parent=79 // pred_check
          %p1172 = pneg %p1171
        $region82: #{adamoco_forward.1} parent=79 // pred_check_branch
          %1174 = sbr.rel (%p1172) target = $region84
        $region83: #{adamoco_forward.1} parent=79 // pred_region
          %1175 = vst [vmem:[#allocation2] sm:$0xf] 0.0
          %1176 = vst [vmem:[#allocation3] sm:$0xf] 0.0
        $region84: #{adamoco_forward.1} parent=79 // pred_fallthru
          _
        %v1177 = vld [vmem:[#allocation2] sm:$0xf]
        %v1178 = vld [vmem:[%s758] sm:$0x3]
        %v1179 = vpack.c.bf16 %v789, %v787
        %v1180 = vpack.c.bf16 %v790, %v788
        %v1181 = vpack.c.bf16 %v793, %v791
        %v1182 = vpack.c.bf16 %v794, %v792
        %v1183 = vpack.c.bf16 %v797, %v795
        %v1184 = vpack.c.bf16 %v798, %v796
        %v1185 = vpack.c.bf16 %v801, %v799
        %v1186 = vpack.c.bf16 %v802, %v800
        %v1187 = vpack.c.bf16 %v805, %v803
        %v1188 = vpack.c.bf16 %v806, %v804
        %v1189 = vpack.c.bf16 %v809, %v807
        %v1190 = vpack.c.bf16 %v810, %v808
        %v1191 = vpack.c.bf16 %v813, %v811
        %v1192 = vpack.c.bf16 %v814, %v812
        %v1193 = vpack.c.bf16 %v817, %v815
        %v1194 = vpack.c.bf16 %v818, %v816
        %v1195 = vpack.c.bf16 %v821, %v819
        %v1196 = vpack.c.bf16 %v822, %v820
        %v1197 = vpack.c.bf16 %v825, %v823
        %v1198 = vpack.c.bf16 %v826, %v824
        %v1199 = vpack.c.bf16 %v829, %v827
        %v1200 = vpack.c.bf16 %v830, %v828
        %v1201 = vpack.c.bf16 %v833, %v831
        %v1202 = vpack.c.bf16 %v834, %v832
        %v1203 = vpack.c.bf16 %v837, %v835
        %v1204 = vpack.c.bf16 %v838, %v836
        %v1205 = vpack.c.bf16 %v841, %v839
        %v1206 = vpack.c.bf16 %v842, %v840
        %v1207 = vpack.c.bf16 %v845, %v843
        %v1208 = vpack.c.bf16 %v846, %v844
        %v1209 = vpack.c.bf16 %v849, %v847
        %v1210 = vpack.c.bf16 %v850, %v848
        %v1213 = vunpack.c.l.s4 1966171168
        %v1214 = vunpack.c.0.s8 %v1213
        %v1215 = vlaneseq
        %v1216 = vshrl.u32 %v1215, 7
        %v1217 = vsub.s32 %v1214, %v1216
        %v1218 = vrot.slane %v1178, %v1217
        %v1219 = vcombine.high %v1218, %v1218
        %v1221 = vunpack.c.l.s4 1966171168
        %v1222 = vunpack.c.0.s8 %v1221
        %v1223 = vlaneseq
        %v1224 = vshrl.u32 %v1223, 7
        %v1225 = vsub.s32 %v1222, %v1224
        %v1226 = vrot.slane %v1218, %v1225
        %v1228 = vunpack.c.l.s4 1966171168
        %v1229 = vunpack.c.0.s8 %v1228
        %v1230 = vlaneseq
        %v1231 = vshrl.u32 %v1230, 7
        %v1232 = vsub.s32 %v1229, %v1231
        %v1233 = vrot.slane %v1219, %v1232
        %1236 = vmatprep.subr.bf16.mxu0 %v1180
        %1237 = vmatpush1.bf16.msra.mxu0 %v1179
        %1238 = vmatprep.subr.bf16.mxu0 %v1182
        %1239 = vmatpush1.bf16.msra.mxu0 %v1181
        %1240 = vmatprep.subr.bf16.mxu0 %v1184
        %1241 = vmatpush1.bf16.msra.mxu0 %v1183
        %1242 = vmatprep.subr.bf16.mxu0 %v1186
        %1243 = vmatpush1.bf16.msra.mxu0 %v1185
        %1244 = vmatprep.subr.bf16.mxu0 %v1188
        %1245 = vmatpush1.bf16.msra.mxu0 %v1187
        %1246 = vmatprep.subr.bf16.mxu0 %v1190
        %1247 = vmatpush1.bf16.msra.mxu0 %v1189
        %1248 = vmatprep.subr.bf16.mxu0 %v1192
        %1249 = vmatpush1.bf16.msra.mxu0 %v1191
        %1250 = vmatprep.subr.bf16.mxu0 %v1194
        %1251 = vmatpush1.bf16.msra.mxu0 %v1193
        %1252 = vmatprep.subr.bf16.mxu0 %v1196
        %1253 = vmatpush1.bf16.msra.mxu0 %v1195
        %1254 = vmatprep.subr.bf16.mxu0 %v1198
        %1255 = vmatpush1.bf16.msra.mxu0 %v1197
        %1256 = vmatprep.subr.bf16.mxu0 %v1200
        %1257 = vmatpush1.bf16.msra.mxu0 %v1199
        %1258 = vmatprep.subr.bf16.mxu0 %v1202
        %1259 = vmatpush1.bf16.msra.mxu0 %v1201
        %1260 = vmatprep.subr.bf16.mxu0 %v1204
        %1261 = vmatpush1.bf16.msra.mxu0 %v1203
        %1262 = vmatprep.subr.bf16.mxu0 %v1206
        %1263 = vmatpush1.bf16.msra.mxu0 %v1205
        %1264 = vmatprep.subr.bf16.mxu0 %v1208
        %1265 = vmatpush1.bf16.msra.mxu0 %v1207
        %1266 = vmatprep.subr.bf16.mxu0 %v1210
        %1267 = vmatpush1.bf16.msra.mxu0 %v1209
        %1268 = vmatprep.mubr.bf16.mxu0 %v1233
        %1269 = vmatmul.mubr.bf16.gmra.mrb[0].mxu0 %v1226
        %v1270 = vpop.f32.mrb[0].mxu0
        %v1271 = vadd.f32 0.0, %v1270
        %v1272 = vpop.f32.mrb[0].mxu0
        %v1273 = vadd.f32 0.0, %v1272
        %v1274 = vpop.f32.mrb[0].mxu0
        %v1275 = vpop.f32.mrb[0].mxu0
        %1276 = vdwg.mxu0
        %v1279 = vcombine.low %v1271, %v1273
        %v1281 = vunpack.c.l.s4 1983009808
        %v1282 = vunpack.c.0.s8 %v1281
        %v1283 = vlaneseq
        %v1284 = vshrl.u32 %v1283, 7
        %v1285 = vsub.s32 %v1282, %v1284
        %v1286 = vrot.slane %v1279, %v1285
        %v1288 = vadd.f32 %v1177, %v1286
        %1289 = vst [vmem:[#allocation2] sm:$0xf] %v1288
        %v1290 = vld [vmem:[#allocation3] sm:$0xf]
        %v1291 = vld [vmem:[%s763] sm:$0x3]
        %v1292 = vpack.c.bf16 %v1045, %v1043
        %v1293 = vpack.c.bf16 %v1046, %v1044
        %v1294 = vpack.c.bf16 %v1049, %v1047
        %v1295 = vpack.c.bf16 %v1050, %v1048
        %v1296 = vpack.c.bf16 %v1053, %v1051
        %v1297 = vpack.c.bf16 %v1054, %v1052
        %v1298 = vpack.c.bf16 %v1057, %v1055
        %v1299 = vpack.c.bf16 %v1058, %v1056
        %v1300 = vpack.c.bf16 %v1061, %v1059
        %v1301 = vpack.c.bf16 %v1062, %v1060
        %v1302 = vpack.c.bf16 %v1065, %v1063
        %v1303 = vpack.c.bf16 %v1066, %v1064
        %v1304 = vpack.c.bf16 %v1069, %v1067
        %v1305 = vpack.c.bf16 %v1070, %v1068
        %v1306 = vpack.c.bf16 %v1073, %v1071
        %v1307 = vpack.c.bf16 %v1074, %v1072
        %v1308 = vpack.c.bf16 %v1077, %v1075
        %v1309 = vpack.c.bf16 %v1078, %v1076
        %v1310 = vpack.c.bf16 %v1081, %v1079
        %v1311 = vpack.c.bf16 %v1082, %v1080
        %v1312 = vpack.c.bf16 %v1085, %v1083
        %v1313 = vpack.c.bf16 %v1086, %v1084
        %v1314 = vpack.c.bf16 %v1089, %v1087
        %v1315 = vpack.c.bf16 %v1090, %v1088
        %v1316 = vpack.c.bf16 %v1093, %v1091
        %v1317 = vpack.c.bf16 %v1094, %v1092
        %v1318 = vpack.c.bf16 %v1097, %v1095
        %v1319 = vpack.c.bf16 %v1098, %v1096
        %v1320 = vpack.c.bf16 %v1101, %v1099
        %v1321 = vpack.c.bf16 %v1102, %v1100
        %v1322 = vpack.c.bf16 %v1105, %v1103
        %v1323 = vpack.c.bf16 %v1106, %v1104
        %v1326 = vunpack.c.l.s4 1966171168
        %v1327 = vunpack.c.0.s8 %v1326
        %v1328 = vlaneseq
        %v1329 = vshrl.u32 %v1328, 7
        %v1330 = vsub.s32 %v1327, %v1329
        %v1331 = vrot.slane %v1291, %v1330
        %v1332 = vcombine.high %v1331, %v1331
        %v1334 = vunpack.c.l.s4 1966171168
        %v1335 = vunpack.c.0.s8 %v1334
        %v1336 = vlaneseq
        %v1337 = vshrl.u32 %v1336, 7
        %v1338 = vsub.s32 %v1335, %v1337
        %v1339 = vrot.slane %v1331, %v1338
        %v1341 = vunpack.c.l.s4 1966171168
        %v1342 = vunpack.c.0.s8 %v1341
        %v1343 = vlaneseq
        %v1344 = vshrl.u32 %v1343, 7
        %v1345 = vsub.s32 %v1342, %v1344
        %v1346 = vrot.slane %v1332, %v1345
        %1349 = vmatprep.subr.bf16.mxu0 %v1293
        %1350 = vmatpush1.bf16.msra.mxu0 %v1292
        %1351 = vmatprep.subr.bf16.mxu0 %v1295
        %1352 = vmatpush1.bf16.msra.mxu0 %v1294
        %1353 = vmatprep.subr.bf16.mxu0 %v1297
        %1354 = vmatpush1.bf16.msra.mxu0 %v1296
        %1355 = vmatprep.subr.bf16.mxu0 %v1299
        %1356 = vmatpush1.bf16.msra.mxu0 %v1298
        %1357 = vmatprep.subr.bf16.mxu0 %v1301
        %1358 = vmatpush1.bf16.msra.mxu0 %v1300
        %1359 = vmatprep.subr.bf16.mxu0 %v1303
        %1360 = vmatpush1.bf16.msra.mxu0 %v1302
        %1361 = vmatprep.subr.bf16.mxu0 %v1305
        %1362 = vmatpush1.bf16.msra.mxu0 %v1304
        %1363 = vmatprep.subr.bf16.mxu0 %v1307
        %1364 = vmatpush1.bf16.msra.mxu0 %v1306
        %1365 = vmatprep.subr.bf16.mxu0 %v1309
        %1366 = vmatpush1.bf16.msra.mxu0 %v1308
        %1367 = vmatprep.subr.bf16.mxu0 %v1311
        %1368 = vmatpush1.bf16.msra.mxu0 %v1310
        %1369 = vmatprep.subr.bf16.mxu0 %v1313
        %1370 = vmatpush1.bf16.msra.mxu0 %v1312
        %1371 = vmatprep.subr.bf16.mxu0 %v1315
        %1372 = vmatpush1.bf16.msra.mxu0 %v1314
        %1373 = vmatprep.subr.bf16.mxu0 %v1317
        %1374 = vmatpush1.bf16.msra.mxu0 %v1316
        %1375 = vmatprep.subr.bf16.mxu0 %v1319
        %1376 = vmatpush1.bf16.msra.mxu0 %v1318
        %1377 = vmatprep.subr.bf16.mxu0 %v1321
        %1378 = vmatpush1.bf16.msra.mxu0 %v1320
        %1379 = vmatprep.subr.bf16.mxu0 %v1323
        %1380 = vmatpush1.bf16.msra.mxu0 %v1322
        %1381 = vmatprep.mubr.bf16.mxu0 %v1346
        %1382 = vmatmul.mubr.bf16.gmra.mrb[0].mxu0 %v1339
        %v1383 = vpop.f32.mrb[0].mxu0
        %v1384 = vadd.f32 0.0, %v1383
        %v1385 = vpop.f32.mrb[0].mxu0
        %v1386 = vadd.f32 0.0, %v1385
        %v1387 = vpop.f32.mrb[0].mxu0
        %v1388 = vpop.f32.mrb[0].mxu0
        %1389 = vdwg.mxu0
        %v1392 = vcombine.low %v1384, %v1386
        %v1394 = vunpack.c.l.s4 1983009808
        %v1395 = vunpack.c.0.s8 %v1394
        %v1396 = vlaneseq
        %v1397 = vshrl.u32 %v1396, 7
        %v1398 = vsub.s32 %v1395, %v1397
        %v1399 = vrot.slane %v1392, %v1398
        %v1401 = vadd.f32 %v1290, %v1399
        %1402 = vst [vmem:[#allocation3] sm:$0xf] %v1401
        %p1403 = scmp.eq.s32.totalorder %s39, 3
        // Predicated region
        $region85: #{adamoco_forward.1} parent=79 // pred_check
          %p1404 = pneg %p1403
        $region86: #{adamoco_forward.1} parent=79 // pred_check_branch
          %1406 = sbr.rel (%p1404) target = $region88
        $region87: #{adamoco_forward.1} parent=79 // pred_region
          %v1407 = vld [vmem:[%s3] sm:$0x3]
          %v1408 = vld [vmem:[%s4] sm:$0xff]
          %v1409 = vld [vmem:[%s4 + $0x8] sm:$0xff]
          %v1410 = vld [vmem:[%s4 + $0x10] sm:$0xff]
          %v1411 = vld [vmem:[%s4 + $0x18] sm:$0xff]
          %v1412 = vld [vmem:[%s4 + $0x20] sm:$0xff]
          %v1413 = vld [vmem:[%s4 + $0x28] sm:$0xff]
          %v1414 = vld [vmem:[%s4 + $0x30] sm:$0xff]
          %v1415 = vld [vmem:[%s4 + $0x38] sm:$0xff]
          %v1416 = vld [vmem:[%s4 + $0x40] sm:$0xff]
          %v1417 = vld [vmem:[%s4 + $0x48] sm:$0xff]
          %v1418 = vld [vmem:[%s4 + $0x50] sm:$0xff]
          %v1419 = vld [vmem:[%s4 + $0x58] sm:$0xff]
          %v1420 = vld [vmem:[%s4 + $0x60] sm:$0xff]
          %v1421 = vld [vmem:[%s4 + $0x68] sm:$0xff]
          %v1422 = vld [vmem:[%s4 + $0x70] sm:$0xff]
          %v1423 = vld [vmem:[%s4 + $0x78] sm:$0xff]
          %v1424 = vld [vmem:[%s4 + $0x80] sm:$0xff]
          %v1425 = vld [vmem:[%s4 + $0x88] sm:$0xff]
          %v1426 = vld [vmem:[%s4 + $0x90] sm:$0xff]
          %v1427 = vld [vmem:[%s4 + $0x98] sm:$0xff]
          %v1428 = vld [vmem:[%s4 + $0xa0] sm:$0xff]
          %v1429 = vld [vmem:[%s4 + $0xa8] sm:$0xff]
          %v1430 = vld [vmem:[%s4 + $0xb0] sm:$0xff]
          %v1431 = vld [vmem:[%s4 + $0xb8] sm:$0xff]
          %v1432 = vld [vmem:[%s4 + $0xc0] sm:$0xff]
          %v1433 = vld [vmem:[%s4 + $0xc8] sm:$0xff]
          %v1434 = vld [vmem:[%s4 + $0xd0] sm:$0xff]
          %v1435 = vld [vmem:[%s4 + $0xd8] sm:$0xff]
          %v1436 = vld [vmem:[%s4 + $0xe0] sm:$0xff]
          %v1437 = vld [vmem:[%s4 + $0xe8] sm:$0xff]
          %v1438 = vld [vmem:[%s4 + $0xf0] sm:$0xff]
          %v1439 = vld [vmem:[%s4 + $0xf8] sm:$0xff]
          %v1440 = vld [vmem:[%s5] sm:$0x1]
          %v1441 = vld [vmem:[%s6] sm:$0xff]
          %v1442 = vld [vmem:[%s6 + $0x8] sm:$0xff]
          %v1443 = vld [vmem:[%s6 + $0x10] sm:$0xff]
          %v1444 = vld [vmem:[%s6 + $0x18] sm:$0xff]
          %v1445 = vld [vmem:[%s6 + $0x20] sm:$0xff]
          %v1446 = vld [vmem:[%s6 + $0x28] sm:$0xff]
          %v1447 = vld [vmem:[%s6 + $0x30] sm:$0xff]
          %v1448 = vld [vmem:[%s6 + $0x38] sm:$0xff]
          %v1449 = vld [vmem:[%s6 + $0x40] sm:$0xff]
          %v1450 = vld [vmem:[%s6 + $0x48] sm:$0xff]
          %v1451 = vld [vmem:[%s6 + $0x50] sm:$0xff]
          %v1452 = vld [vmem:[%s6 + $0x58] sm:$0xff]
          %v1453 = vld [vmem:[%s6 + $0x60] sm:$0xff]
          %v1454 = vld [vmem:[%s6 + $0x68] sm:$0xff]
          %v1455 = vld [vmem:[%s6 + $0x70] sm:$0xff]
          %v1456 = vld [vmem:[%s6 + $0x78] sm:$0xff]
          %v1457 = vld [vmem:[%s7] sm:$0x1]
          %v1458 = vld [vmem:[%s9] sm:$0x3]
          %v1459 = vmul.f32 %v1458, 0.999
          %v1460 = vmul.f32 %v1407, 0.001
          %v1461 = vadd.f32 %v1459, %v1460
          %v1462 = vld [vmem:[%s10] sm:$0xff]
          %v1463 = vld [vmem:[%s10 + $0x8] sm:$0xff]
          %v1464 = vld [vmem:[%s10 + $0x10] sm:$0xff]
          %v1465 = vld [vmem:[%s10 + $0x18] sm:$0xff]
          %v1466 = vld [vmem:[%s10 + $0x20] sm:$0xff]
          %v1467 = vld [vmem:[%s10 + $0x28] sm:$0xff]
          %v1468 = vld [vmem:[%s10 + $0x30] sm:$0xff]
          %v1469 = vld [vmem:[%s10 + $0x38] sm:$0xff]
          %v1470 = vld [vmem:[%s10 + $0x40] sm:$0xff]
          %v1471 = vld [vmem:[%s10 + $0x48] sm:$0xff]
          %v1472 = vld [vmem:[%s10 + $0x50] sm:$0xff]
          %v1473 = vld [vmem:[%s10 + $0x58] sm:$0xff]
          %v1474 = vld [vmem:[%s10 + $0x60] sm:$0xff]
          %v1475 = vld [vmem:[%s10 + $0x68] sm:$0xff]
          %v1476 = vld [vmem:[%s10 + $0x70] sm:$0xff]
          %v1477 = vld [vmem:[%s10 + $0x78] sm:$0xff]
          %v1478 = vld [vmem:[%s10 + $0x80] sm:$0xff]
          %v1479 = vld [vmem:[%s10 + $0x88] sm:$0xff]
          %v1480 = vld [vmem:[%s10 + $0x90] sm:$0xff]
          %v1481 = vld [vmem:[%s10 + $0x98] sm:$0xff]
          %v1482 = vld [vmem:[%s10 + $0xa0] sm:$0xff]
          %v1483 = vld [vmem:[%s10 + $0xa8] sm:$0xff]
          %v1484 = vld [vmem:[%s10 + $0xb0] sm:$0xff]
          %v1485 = vld [vmem:[%s10 + $0xb8] sm:$0xff]
          %v1486 = vld [vmem:[%s10 + $0xc0] sm:$0xff]
          %v1487 = vld [vmem:[%s10 + $0xc8] sm:$0xff]
          %v1488 = vld [vmem:[%s10 + $0xd0] sm:$0xff]
          %v1489 = vld [vmem:[%s10 + $0xd8] sm:$0xff]
          %v1490 = vld [vmem:[%s10 + $0xe0] sm:$0xff]
          %v1491 = vld [vmem:[%s10 + $0xe8] sm:$0xff]
          %v1492 = vld [vmem:[%s10 + $0xf0] sm:$0xff]
          %v1493 = vld [vmem:[%s10 + $0xf8] sm:$0xff]
          %v1494 = vmul.f32 %v1462, 0.999
          %v1495 = vmul.f32 %v1463, 0.999
          %v1496 = vmul.f32 %v1464, 0.999
          %v1497 = vmul.f32 %v1465, 0.999
          %v1498 = vmul.f32 %v1466, 0.999
          %v1499 = vmul.f32 %v1467, 0.999
          %v1500 = vmul.f32 %v1468, 0.999
          %v1501 = vmul.f32 %v1469, 0.999
          %v1502 = vmul.f32 %v1470, 0.999
          %v1503 = vmul.f32 %v1471, 0.999
          %v1504 = vmul.f32 %v1472, 0.999
          %v1505 = vmul.f32 %v1473, 0.999
          %v1506 = vmul.f32 %v1474, 0.999
          %v1507 = vmul.f32 %v1475, 0.999
          %v1508 = vmul.f32 %v1476, 0.999
          %v1509 = vmul.f32 %v1477, 0.999
          %v1510 = vmul.f32 %v1478, 0.999
          %v1511 = vmul.f32 %v1479, 0.999
          %v1512 = vmul.f32 %v1480, 0.999
          %v1513 = vmul.f32 %v1481, 0.999
          %v1514 = vmul.f32 %v1482, 0.999
          %v1515 = vmul.f32 %v1483, 0.999
          %v1516 = vmul.f32 %v1484, 0.999
          %v1517 = vmul.f32 %v1485, 0.999
          %v1518 = vmul.f32 %v1486, 0.999
          %v1519 = vmul.f32 %v1487, 0.999
          %v1520 = vmul.f32 %v1488, 0.999
          %v1521 = vmul.f32 %v1489, 0.999
          %v1522 = vmul.f32 %v1490, 0.999
          %v1523 = vmul.f32 %v1491, 0.999
          %v1524 = vmul.f32 %v1492, 0.999
          %v1525 = vmul.f32 %v1493, 0.999
          %v1526 = vmul.f32 %v1408, 0.001
          %v1527 = vmul.f32 %v1409, 0.001
          %v1528 = vmul.f32 %v1410, 0.001
          %v1529 = vmul.f32 %v1411, 0.001
          %v1530 = vmul.f32 %v1412, 0.001
          %v1531 = vmul.f32 %v1413, 0.001
          %v1532 = vmul.f32 %v1414, 0.001
          %v1533 = vmul.f32 %v1415, 0.001
          %v1534 = vmul.f32 %v1416, 0.001
          %v1535 = vmul.f32 %v1417, 0.001
          %v1536 = vmul.f32 %v1418, 0.001
          %v1537 = vmul.f32 %v1419, 0.001
          %v1538 = vmul.f32 %v1420, 0.001
          %v1539 = vmul.f32 %v1421, 0.001
          %v1540 = vmul.f32 %v1422, 0.001
          %v1541 = vmul.f32 %v1423, 0.001
          %v1542 = vmul.f32 %v1424, 0.001
          %v1543 = vmul.f32 %v1425, 0.001
          %v1544 = vmul.f32 %v1426, 0.001
          %v1545 = vmul.f32 %v1427, 0.001
          %v1546 = vmul.f32 %v1428, 0.001
          %v1547 = vmul.f32 %v1429, 0.001
          %v1548 = vmul.f32 %v1430, 0.001
          %v1549 = vmul.f32 %v1431, 0.001
          %v1550 = vmul.f32 %v1432, 0.001
          %v1551 = vmul.f32 %v1433, 0.001
          %v1552 = vmul.f32 %v1434, 0.001
          %v1553 = vmul.f32 %v1435, 0.001
          %v1554 = vmul.f32 %v1436, 0.001
          %v1555 = vmul.f32 %v1437, 0.001
          %v1556 = vmul.f32 %v1438, 0.001
          %v1557 = vmul.f32 %v1439, 0.001
          %v1558 = vadd.f32 %v1494, %v1526
          %v1559 = vadd.f32 %v1495, %v1527
          %v1560 = vadd.f32 %v1496, %v1528
          %v1561 = vadd.f32 %v1497, %v1529
          %v1562 = vadd.f32 %v1498, %v1530
          %v1563 = vadd.f32 %v1499, %v1531
          %v1564 = vadd.f32 %v1500, %v1532
          %v1565 = vadd.f32 %v1501, %v1533
          %v1566 = vadd.f32 %v1502, %v1534
          %v1567 = vadd.f32 %v1503, %v1535
          %v1568 = vadd.f32 %v1504, %v1536
          %v1569 = vadd.f32 %v1505, %v1537
          %v1570 = vadd.f32 %v1506, %v1538
          %v1571 = vadd.f32 %v1507, %v1539
          %v1572 = vadd.f32 %v1508, %v1540
          %v1573 = vadd.f32 %v1509, %v1541
          %v1574 = vadd.f32 %v1510, %v1542
          %v1575 = vadd.f32 %v1511, %v1543
          %v1576 = vadd.f32 %v1512, %v1544
          %v1577 = vadd.f32 %v1513, %v1545
          %v1578 = vadd.f32 %v1514, %v1546
          %v1579 = vadd.f32 %v1515, %v1547
          %v1580 = vadd.f32 %v1516, %v1548
          %v1581 = vadd.f32 %v1517, %v1549
          %v1582 = vadd.f32 %v1518, %v1550
          %v1583 = vadd.f32 %v1519, %v1551
          %v1584 = vadd.f32 %v1520, %v1552
          %v1585 = vadd.f32 %v1521, %v1553
          %v1586 = vadd.f32 %v1522, %v1554
          %v1587 = vadd.f32 %v1523, %v1555
          %v1588 = vadd.f32 %v1524, %v1556
          %v1589 = vadd.f32 %v1525, %v1557
          %v1590 = vld [vmem:[%s11] sm:$0x1]
          %v1591 = vmul.f32 %v1590, 0.999
          %v1592 = vmul.f32 %v1440, 0.001
          %v1593 = vadd.f32 %v1591, %v1592
          %v1594 = vld [vmem:[%s12] sm:$0xff]
          %v1595 = vld [vmem:[%s12 + $0x8] sm:$0xff]
          %v1596 = vld [vmem:[%s12 + $0x10] sm:$0xff]
          %v1597 = vld [vmem:[%s12 + $0x18] sm:$0xff]
          %v1598 = vld [vmem:[%s12 + $0x20] sm:$0xff]
          %v1599 = vld [vmem:[%s12 + $0x28] sm:$0xff]
          %v1600 = vld [vmem:[%s12 + $0x30] sm:$0xff]
          %v1601 = vld [vmem:[%s12 + $0x38] sm:$0xff]
          %v1602 = vld [vmem:[%s12 + $0x40] sm:$0xff]
          %v1603 = vld [vmem:[%s12 + $0x48] sm:$0xff]
          %v1604 = vld [vmem:[%s12 + $0x50] sm:$0xff]
          %v1605 = vld [vmem:[%s12 + $0x58] sm:$0xff]
          %v1606 = vld [vmem:[%s12 + $0x60] sm:$0xff]
          %v1607 = vld [vmem:[%s12 + $0x68] sm:$0xff]
          %v1608 = vld [vmem:[%s12 + $0x70] sm:$0xff]
          %v1609 = vld [vmem:[%s12 + $0x78] sm:$0xff]
          %v1610 = vmul.f32 %v1594, 0.999
          %v1611 = vmul.f32 %v1595, 0.999
          %v1612 = vmul.f32 %v1596, 0.999
          %v1613 = vmul.f32 %v1597, 0.999
          %v1614 = vmul.f32 %v1598, 0.999
          %v1615 = vmul.f32 %v1599, 0.999
          %v1616 = vmul.f32 %v1600, 0.999
          %v1617 = vmul.f32 %v1601, 0.999
          %v1618 = vmul.f32 %v1602, 0.999
          %v1619 = vmul.f32 %v1603, 0.999
          %v1620 = vmul.f32 %v1604, 0.999
          %v1621 = vmul.f32 %v1605, 0.999
          %v1622 = vmul.f32 %v1606, 0.999
          %v1623 = vmul.f32 %v1607, 0.999
          %v1624 = vmul.f32 %v1608, 0.999
          %v1625 = vmul.f32 %v1609, 0.999
          %v1626 = vmul.f32 %v1441, 0.001
          %v1627 = vmul.f32 %v1442, 0.001
          %v1628 = vmul.f32 %v1443, 0.001
          %v1629 = vmul.f32 %v1444, 0.001
          %v1630 = vmul.f32 %v1445, 0.001
          %v1631 = vmul.f32 %v1446, 0.001
          %v1632 = vmul.f32 %v1447, 0.001
          %v1633 = vmul.f32 %v1448, 0.001
          %v1634 = vmul.f32 %v1449, 0.001
          %v1635 = vmul.f32 %v1450, 0.001
          %v1636 = vmul.f32 %v1451, 0.001
          %v1637 = vmul.f32 %v1452, 0.001
          %v1638 = vmul.f32 %v1453, 0.001
          %v1639 = vmul.f32 %v1454, 0.001
          %v1640 = vmul.f32 %v1455, 0.001
          %v1641 = vmul.f32 %v1456, 0.001
          %v1642 = vadd.f32 %v1610, %v1626
          %v1643 = vadd.f32 %v1611, %v1627
          %v1644 = vadd.f32 %v1612, %v1628
          %v1645 = vadd.f32 %v1613, %v1629
          %v1646 = vadd.f32 %v1614, %v1630
          %v1647 = vadd.f32 %v1615, %v1631
          %v1648 = vadd.f32 %v1616, %v1632
          %v1649 = vadd.f32 %v1617, %v1633
          %v1650 = vadd.f32 %v1618, %v1634
          %v1651 = vadd.f32 %v1619, %v1635
          %v1652 = vadd.f32 %v1620, %v1636
          %v1653 = vadd.f32 %v1621, %v1637
          %v1654 = vadd.f32 %v1622, %v1638
          %v1655 = vadd.f32 %v1623, %v1639
          %v1656 = vadd.f32 %v1624, %v1640
          %v1657 = vadd.f32 %v1625, %v1641
          %v1658 = vld [vmem:[%s13] sm:$0x1]
          %v1659 = vmul.f32 %v1658, 0.999
          %v1660 = vmul.f32 %v1457, 0.001
          %v1661 = vadd.f32 %v1659, %v1660
          %v1662 = vlaneseq
          %vm1663 = vcmp.ge.s32.totalorder %v1662, 0
          %vm1664 = vcmp.lt.s32.totalorder %v1662, 256
          %vm1665 = vmand %vm1663, %vm1664
          %1666 = vst.msk [vmem:[%s20] sm:$0x3] %vm1665, %v1461
          %1667 = vst [vmem:[%s21] sm:$0xff] %v1558
          %1668 = vst [vmem:[%s21 + $0x8] sm:$0xff] %v1559
          %1669 = vst [vmem:[%s21 + $0x10] sm:$0xff] %v1560
          %1670 = vst [vmem:[%s21 + $0x18] sm:$0xff] %v1561
          %1671 = vst [vmem:[%s21 + $0x20] sm:$0xff] %v1562
          %1672 = vst [vmem:[%s21 + $0x28] sm:$0xff] %v1563
          %1673 = vst [vmem:[%s21 + $0x30] sm:$0xff] %v1564
          %1674 = vst [vmem:[%s21 + $0x38] sm:$0xff] %v1565
          %1675 = vst [vmem:[%s21 + $0x40] sm:$0xff] %v1566
          %1676 = vst [vmem:[%s21 + $0x48] sm:$0xff] %v1567
          %1677 = vst [vmem:[%s21 + $0x50] sm:$0xff] %v1568
          %1678 = vst [vmem:[%s21 + $0x58] sm:$0xff] %v1569
          %1679 = vst [vmem:[%s21 + $0x60] sm:$0xff] %v1570
          %1680 = vst [vmem:[%s21 + $0x68] sm:$0xff] %v1571
          %1681 = vst [vmem:[%s21 + $0x70] sm:$0xff] %v1572
          %1682 = vst [vmem:[%s21 + $0x78] sm:$0xff] %v1573
          %1683 = vst [vmem:[%s21 + $0x80] sm:$0xff] %v1574
          %1684 = vst [vmem:[%s21 + $0x88] sm:$0xff] %v1575
          %1685 = vst [vmem:[%s21 + $0x90] sm:$0xff] %v1576
          %1686 = vst [vmem:[%s21 + $0x98] sm:$0xff] %v1577
          %1687 = vst [vmem:[%s21 + $0xa0] sm:$0xff] %v1578
          %1688 = vst [vmem:[%s21 + $0xa8] sm:$0xff] %v1579
          %1689 = vst [vmem:[%s21 + $0xb0] sm:$0xff] %v1580
          %1690 = vst [vmem:[%s21 + $0xb8] sm:$0xff] %v1581
          %1691 = vst [vmem:[%s21 + $0xc0] sm:$0xff] %v1582
          %1692 = vst [vmem:[%s21 + $0xc8] sm:$0xff] %v1583
          %1693 = vst [vmem:[%s21 + $0xd0] sm:$0xff] %v1584
          %1694 = vst [vmem:[%s21 + $0xd8] sm:$0xff] %v1585
          %1695 = vst [vmem:[%s21 + $0xe0] sm:$0xff] %v1586
          %1696 = vst [vmem:[%s21 + $0xe8] sm:$0xff] %v1587
          %1697 = vst [vmem:[%s21 + $0xf0] sm:$0xff] %v1588
          %1698 = vst [vmem:[%s21 + $0xf8] sm:$0xff] %v1589
          %1699 = vst [vmem:[%s22] sm:$0x1] %v1593
          %1700 = vst [vmem:[%s23] sm:$0xff] %v1642
          %1701 = vst [vmem:[%s23 + $0x8] sm:$0xff] %v1643
          %1702 = vst [vmem:[%s23 + $0x10] sm:$0xff] %v1644
          %1703 = vst [vmem:[%s23 + $0x18] sm:$0xff] %v1645
          %1704 = vst [vmem:[%s23 + $0x20] sm:$0xff] %v1646
          %1705 = vst [vmem:[%s23 + $0x28] sm:$0xff] %v1647
          %1706 = vst [vmem:[%s23 + $0x30] sm:$0xff] %v1648
          %1707 = vst [vmem:[%s23 + $0x38] sm:$0xff] %v1649
          %1708 = vst [vmem:[%s23 + $0x40] sm:$0xff] %v1650
          %1709 = vst [vmem:[%s23 + $0x48] sm:$0xff] %v1651
          %1710 = vst [vmem:[%s23 + $0x50] sm:$0xff] %v1652
          %1711 = vst [vmem:[%s23 + $0x58] sm:$0xff] %v1653
          %1712 = vst [vmem:[%s23 + $0x60] sm:$0xff] %v1654
          %1713 = vst [vmem:[%s23 + $0x68] sm:$0xff] %v1655
          %1714 = vst [vmem:[%s23 + $0x70] sm:$0xff] %v1656
          %1715 = vst [vmem:[%s23 + $0x78] sm:$0xff] %v1657
          %1716 = vst [vmem:[%s24] sm:$0x1] %v1661
          %v1717 = vld [vmem:[#allocation2] sm:$0xf]
          %v1719 = vlaneseq
          %v1720 = vshrl.u32 %v1719, 7
          %v1721 = vsub.s32 0, %v1720
          %v1722 = vrot.slane %v1407, %v1721
          %v1723 = vlaneseq
          %v1724 = vshrl.u32 %v1723, 7
          %v1725 = vsub.s32 1, %v1724
          %v1726 = vrot.slane %v1407, %v1725
          %v1727 = vcombine.low %v1722, %v1726
          %v1729 = vunpack.c.l.s4 1983009808
          %v1730 = vunpack.c.0.s8 %v1729
          %v1731 = vlaneseq
          %v1732 = vshrl.u32 %v1731, 7
          %v1733 = vsub.s32 %v1730, %v1732
          %v1734 = vrot.slane %v1727, %v1733
          %v1736 = vadd.f32 %v1717, %v1734
          %v1737 = vmax.f32 %v1736, 0.0
          %v1740 = vunpack.c.l.s4 1983009808
          %v1741 = vunpack.c.0.s8 %v1740
          %v1742 = vlaneseq
          %v1743 = vshrl.u32 %v1742, 7
          %v1744 = vsub.s32 %v1741, %v1743
          %v1745 = vrot.slane %v1737, %v1744
          %v1746 = vcombine.high %v1745, %v1745
          %v1749 = vpack.c.bf16 %v1745, %v1745
          %v1750 = vpack.c.bf16 %v1746, %v1746
          %v1751 = vpack.c.bf16 %v1409, %v1408
          %v1752 = vpack.c.bf16 %v1411, %v1410
          %v1753 = vpack.c.bf16 %v1413, %v1412
          %v1754 = vpack.c.bf16 %v1415, %v1414
          %v1755 = vpack.c.bf16 %v1417, %v1416
          %v1756 = vpack.c.bf16 %v1419, %v1418
          %v1757 = vpack.c.bf16 %v1421, %v1420
          %v1758 = vpack.c.bf16 %v1423, %v1422
          %v1759 = vpack.c.bf16 %v1425, %v1424
          %v1760 = vpack.c.bf16 %v1427, %v1426
          %v1761 = vpack.c.bf16 %v1429, %v1428
          %v1762 = vpack.c.bf16 %v1431, %v1430
          %v1763 = vpack.c.bf16 %v1433, %v1432
          %v1764 = vpack.c.bf16 %v1435, %v1434
          %v1765 = vpack.c.bf16 %v1437, %v1436
          %v1766 = vpack.c.bf16 %v1439, %v1438
          %v1768 = vlaneseq
          %v1769 = vshrl.u32 %v1768, 7
          %v1770 = vsub.s32 0, %v1769
          %v1771 = vrot.slane %v1440, %v1770
          %1773 = vmatprep.subr.bf16.mxu0 0
          %1774 = vmatpush1.bf16.msra.mxu0 %v1751
          %1775 = vmatprep.subr.bf16.mxu0 0
          %1776 = vmatpush1.bf16.msra.mxu0 %v1752
          %1777 = vmatprep.subr.bf16.mxu0 0
          %1778 = vmatpush1.bf16.msra.mxu0 %v1753
          %1779 = vmatprep.subr.bf16.mxu0 0
          %1780 = vmatpush1.bf16.msra.mxu0 %v1754
          %1781 = vmatprep.subr.bf16.mxu0 0
          %1782 = vmatpush1.bf16.msra.mxu0 %v1755
          %1783 = vmatprep.subr.bf16.mxu0 0
          %1784 = vmatpush1.bf16.msra.mxu0 %v1756
          %1785 = vmatprep.subr.bf16.mxu0 0
          %1786 = vmatpush1.bf16.msra.mxu0 %v1757
          %1787 = vmatprep.subr.bf16.mxu0 0
          %1788 = vmatpush1.bf16.msra.mxu0 %v1758
          %1789 = vmatprep.subr.bf16.mxu0 0
          %1790 = vmatpush1.bf16.msra.mxu0 %v1759
          %1791 = vmatprep.subr.bf16.mxu0 0
          %1792 = vmatpush1.bf16.msra.mxu0 %v1760
          %1793 = vmatprep.subr.bf16.mxu0 0
          %1794 = vmatpush1.bf16.msra.mxu0 %v1761
          %1795 = vmatprep.subr.bf16.mxu0 0
          %1796 = vmatpush1.bf16.msra.mxu0 %v1762
          %1797 = vmatprep.subr.bf16.mxu0 0
          %1798 = vmatpush1.bf16.msra.mxu0 %v1763
          %1799 = vmatprep.subr.bf16.mxu0 0
          %1800 = vmatpush1.bf16.msra.mxu0 %v1764
          %1801 = vmatprep.subr.bf16.mxu0 0
          %1802 = vmatpush1.bf16.msra.mxu0 %v1765
          %1803 = vmatprep.subr.bf16.mxu0 0
          %1804 = vmatpush1.bf16.msra.mxu0 %v1766
          %1805 = vmatprep.mubr.bf16.mxu0 %v1750
          %1806 = vmatmul.mubr.bf16.gmra.mrb[0].mxu0 %v1749
          %v1807 = vpop.f32.mrb[0].mxu0
          %v1808 = vadd.f32 %v1771, %v1807
          %v1809 = vpop.f32.mrb[0].mxu0
          %v1810 = vpop.f32.mrb[0].mxu0
          %v1811 = vpop.f32.mrb[0].mxu0
          %1812 = vdwg.mxu0
          %1813 = vst [vmem:[#allocation4] sm:$0x3] %v1808
          %v1814 = vpack.c.bf16 %v1808, %v1808
          %v1815 = vpack.c.bf16 %v1442, %v1441
          %v1816 = vpack.c.bf16 %v1444, %v1443
          %v1817 = vpack.c.bf16 %v1446, %v1445
          %v1818 = vpack.c.bf16 %v1448, %v1447
          %v1819 = vpack.c.bf16 %v1450, %v1449
          %v1820 = vpack.c.bf16 %v1452, %v1451
          %v1821 = vpack.c.bf16 %v1454, %v1453
          %v1822 = vpack.c.bf16 %v1456, %v1455
          %v1824 = vlaneseq
          %v1825 = vshrl.u32 %v1824, 7
          %v1826 = vsub.s32 0, %v1825
          %v1827 = vrot.slane %v1457, %v1826
          %1829 = vmatprep.subr.bf16.mxu0 0
          %1830 = vmatpush1.bf16.msra.mxu0 %v1815
          %1831 = vmatprep.subr.bf16.mxu0 0
          %1832 = vmatpush1.bf16.msra.mxu0 %v1816
          %1833 = vmatprep.subr.bf16.mxu0 0
          %1834 = vmatpush1.bf16.msra.mxu0 %v1817
          %1835 = vmatprep.subr.bf16.mxu0 0
          %1836 = vmatpush1.bf16.msra.mxu0 %v1818
          %1837 = vmatprep.subr.bf16.mxu0 0
          %1838 = vmatpush1.bf16.msra.mxu0 %v1819
          %1839 = vmatprep.subr.bf16.mxu0 0
          %1840 = vmatpush1.bf16.msra.mxu0 %v1820
          %1841 = vmatprep.subr.bf16.mxu0 0
          %1842 = vmatpush1.bf16.msra.mxu0 %v1821
          %1843 = vmatprep.subr.bf16.mxu0 0
          %1844 = vmatpush1.bf16.msra.mxu0 %v1822
          %1845 = vmatprep.subr.bf16.mxu0 0
          %1846 = vmatpush1.bf16.msra.mxu0 0
          %1847 = vmatprep.subr.bf16.mxu0 0
          %1848 = vmatpush1.bf16.msra.mxu0 0
          %1849 = vmatprep.subr.bf16.mxu0 0
          %1850 = vmatpush1.bf16.msra.mxu0 0
          %1851 = vmatprep.subr.bf16.mxu0 0
          %1852 = vmatpush1.bf16.msra.mxu0 0
          %1853 = vmatprep.subr.bf16.mxu0 0
          %1854 = vmatpush1.bf16.msra.mxu0 0
          %1855 = vmatprep.subr.bf16.mxu0 0
          %1856 = vmatpush1.bf16.msra.mxu0 0
          %1857 = vmatprep.subr.bf16.mxu0 0
          %1858 = vmatpush1.bf16.msra.mxu0 0
          %1859 = vmatprep.subr.bf16.mxu0 0
          %1860 = vmatpush1.bf16.msra.mxu0 0
          %1861 = vmatprep.mubr.bf16.mxu0 0
          %1862 = vmatmul.mubr.bf16.gmra.mrb[0].mxu0 %v1814
          %v1863 = vpop.f32.mrb[0].mxu0
          %v1864 = vadd.f32 %v1827, %v1863
          %v1865 = vpop.f32.mrb[0].mxu0
          %v1866 = vpop.f32.mrb[0].mxu0
          %v1867 = vpop.f32.mrb[0].mxu0
          %1868 = vdwg.mxu0
          %1869 = vst [vmem:[#allocation6] sm:$0x3] %v1864
          %v1870 = vmul.f32 %v1808, %v1808
          %vm1871 = vcmask 1041408
          %v1872 = vsel %vm1871, %v1870, 0.0
          %1873 = vadd.xlane.f32.xlu0 %v1872
          %v1874 = vpop.xlane.xlu0 %1873
          %v1875 = vmax.f32 %v1874, 1e-24
          %v1876 = vrsqrt.pop %v1875
          %v1877 = vmul.f32 %v1808, %v1876
          %v1878 = vld [vmem:[#allocation3] sm:$0xf]
          %v1880 = vlaneseq
          %v1881 = vshrl.u32 %v1880, 7
          %v1882 = vsub.s32 0, %v1881
          %v1883 = vrot.slane %v1461, %v1882
          %v1884 = vlaneseq
          %v1885 = vshrl.u32 %v1884, 7
          %v1886 = vsub.s32 1, %v1885
          %v1887 = vrot.slane %v1461, %v1886
          %v1888 = vcombine.low %v1883, %v1887
          %v1890 = vunpack.c.l.s4 1983009808
          %v1891 = vunpack.c.0.s8 %v1890
          %v1892 = vlaneseq
          %v1893 = vshrl.u32 %v1892, 7
          %v1894 = vsub.s32 %v1891, %v1893
          %v1895 = vrot.slane %v1888, %v1894
          %v1897 = vadd.f32 %v1878, %v1895
          %v1898 = vmax.f32 %v1897, 0.0
          %v1901 = vunpack.c.l.s4 1983009808
          %v1902 = vunpack.c.0.s8 %v1901
          %v1903 = vlaneseq
          %v1904 = vshrl.u32 %v1903, 7
          %v1905 = vsub.s32 %v1902, %v1904
          %v1906 = vrot.slane %v1898, %v1905
          %v1907 = vcombine.high %v1906, %v1906
          %v1910 = vpack.c.bf16 %v1906, %v1906
          %v1911 = vpack.c.bf16 %v1907, %v1907
          %v1912 = vpack.c.bf16 %v1559, %v1558
          %v1913 = vpack.c.bf16 %v1561, %v1560
          %v1914 = vpack.c.bf16 %v1563, %v1562
          %v1915 = vpack.c.bf16 %v1565, %v1564
          %v1916 = vpack.c.bf16 %v1567, %v1566
          %v1917 = vpack.c.bf16 %v1569, %v1568
          %v1918 = vpack.c.bf16 %v1571, %v1570
          %v1919 = vpack.c.bf16 %v1573, %v1572
          %v1920 = vpack.c.bf16 %v1575, %v1574
          %v1921 = vpack.c.bf16 %v1577, %v1576
          %v1922 = vpack.c.bf16 %v1579, %v1578
          %v1923 = vpack.c.bf16 %v1581, %v1580
          %v1924 = vpack.c.bf16 %v1583, %v1582
          %v1925 = vpack.c.bf16 %v1585, %v1584
          %v1926 = vpack.c.bf16 %v1587, %v1586
          %v1927 = vpack.c.bf16 %v1589, %v1588
          %v1929 = vlaneseq
          %v1930 = vshrl.u32 %v1929, 7
          %v1931 = vsub.s32 0, %v1930
          %v1932 = vrot.slane %v1593, %v1931
          %1934 = vmatprep.subr.bf16.mxu0 0
          %1935 = vmatpush1.bf16.msra.mxu0 %v1912
          %1936 = vmatprep.subr.bf16.mxu0 0
          %1937 = vmatpush1.bf16.msra.mxu0 %v1913
          %1938 = vmatprep.subr.bf16.mxu0 0
          %1939 = vmatpush1.bf16.msra.mxu0 %v1914
          %1940 = vmatprep.subr.bf16.mxu0 0
          %1941 = vmatpush1.bf16.msra.mxu0 %v1915
          %1942 = vmatprep.subr.bf16.mxu0 0
          %1943 = vmatpush1.bf16.msra.mxu0 %v1916
          %1944 = vmatprep.subr.bf16.mxu0 0
          %1945 = vmatpush1.bf16.msra.mxu0 %v1917
          %1946 = vmatprep.subr.bf16.mxu0 0
          %1947 = vmatpush1.bf16.msra.mxu0 %v1918
          %1948 = vmatprep.subr.bf16.mxu0 0
          %1949 = vmatpush1.bf16.msra.mxu0 %v1919
          %1950 = vmatprep.subr.bf16.mxu0 0
          %1951 = vmatpush1.bf16.msra.mxu0 %v1920
          %1952 = vmatprep.subr.bf16.mxu0 0
          %1953 = vmatpush1.bf16.msra.mxu0 %v1921
          %1954 = vmatprep.subr.bf16.mxu0 0
          %1955 = vmatpush1.bf16.msra.mxu0 %v1922
          %1956 = vmatprep.subr.bf16.mxu0 0
          %1957 = vmatpush1.bf16.msra.mxu0 %v1923
          %1958 = vmatprep.subr.bf16.mxu0 0
          %1959 = vmatpush1.bf16.msra.mxu0 %v1924
          %1960 = vmatprep.subr.bf16.mxu0 0
          %1961 = vmatpush1.bf16.msra.mxu0 %v1925
          %1962 = vmatprep.subr.bf16.mxu0 0
          %1963 = vmatpush1.bf16.msra.mxu0 %v1926
          %1964 = vmatprep.subr.bf16.mxu0 0
          %1965 = vmatpush1.bf16.msra.mxu0 %v1927
          %1966 = vmatprep.mubr.bf16.mxu0 %v1911
          %1967 = vmatmul.mubr.bf16.gmra.mrb[0].mxu0 %v1910
          %v1968 = vpop.f32.mrb[0].mxu0
          %v1969 = vadd.f32 %v1932, %v1968
          %v1970 = vpop.f32.mrb[0].mxu0
          %v1971 = vpop.f32.mrb[0].mxu0
          %v1972 = vpop.f32.mrb[0].mxu0
          %1973 = vdwg.mxu0
          %v1974 = vmul.f32 %v1969, %v1969
          %v1975 = vsel %vm1871, %v1974, 0.0
          %1976 = vadd.xlane.f32.xlu0 %v1975
          %v1977 = vpop.xlane.xlu0 %1976
          %v1978 = vmax.f32 %v1977, 1e-24
          %v1979 = vrsqrt.pop %v1978
          %v1980 = vmul.f32 %v1969, %v1979
          %1981 = vst [vmem:[#allocation9] sm:$0x3] %v1980
          %v1982 = vpack.c.bf16 %v1877, %v1877
          %v1983 = vld [vmem:[%s14] sm:$0xff]
          %v1984 = vld [vmem:[%s14 + $0x8] sm:$0xf]
          %v1985 = vld [vmem:[%s14 + $0xc] sm:$0xff]
          %v1986 = vld [vmem:[%s14 + $0x14] sm:$0xf]
          %v1987 = vld [vmem:[%s14 + $0x18] sm:$0xff]
          %v1988 = vld [vmem:[%s14 + $0x20] sm:$0xf]
          %v1989 = vld [vmem:[%s14 + $0x24] sm:$0xff]
          %v1990 = vld [vmem:[%s14 + $0x2c] sm:$0xf]
          %v1991 = vld [vmem:[%s14 + $0x30] sm:$0xff]
          %v1992 = vld [vmem:[%s14 + $0x38] sm:$0xf]
          %v1993 = vld [vmem:[%s14 + $0x3c] sm:$0xff]
          %v1994 = vld [vmem:[%s14 + $0x44] sm:$0xf]
          %v1995 = vld [vmem:[%s14 + $0x48] sm:$0xff]
          %v1996 = vld [vmem:[%s14 + $0x50] sm:$0xf]
          %v1997 = vld [vmem:[%s14 + $0x54] sm:$0xff]
          %v1998 = vld [vmem:[%s14 + $0x5c] sm:$0xf]
          %v1999 = vld [vmem:[%s14 + $0x60] sm:$0xff]
          %v2000 = vld [vmem:[%s14 + $0x68] sm:$0xf]
          %v2001 = vld [vmem:[%s14 + $0x6c] sm:$0xff]
          %v2002 = vld [vmem:[%s14 + $0x74] sm:$0xf]
          %v2003 = vld [vmem:[%s14 + $0x78] sm:$0xff]
          %v2004 = vld [vmem:[%s14 + $0x80] sm:$0xf]
          %v2005 = vld [vmem:[%s14 + $0x84] sm:$0xff]
          %v2006 = vld [vmem:[%s14 + $0x8c] sm:$0xf]
          %v2007 = vld [vmem:[%s14 + $0x90] sm:$0xff]
          %v2008 = vld [vmem:[%s14 + $0x98] sm:$0xf]
          %v2009 = vld [vmem:[%s14 + $0x9c] sm:$0xff]
          %v2010 = vld [vmem:[%s14 + $0xa4] sm:$0xf]
          %v2011 = vld [vmem:[%s14 + $0xa8] sm:$0xff]
          %v2012 = vld [vmem:[%s14 + $0xb0] sm:$0xf]
          %v2013 = vld [vmem:[%s14 + $0xb4] sm:$0xff]
          %v2014 = vld [vmem:[%s14 + $0xbc] sm:$0xf]
          %v2047 = vunpack.c.l.b16 %v1983
          %v2048 = vunpack.c.h.b16 %v1983
          %v2049 = vunpack.c.l.b16 %v1984
          %v2050 = vunpack.c.l.b16 %v1985
          %v2051 = vunpack.c.h.b16 %v1985
          %v2052 = vunpack.c.l.b16 %v1986
          %v2053 = vunpack.c.l.b16 %v1987
          %v2054 = vunpack.c.h.b16 %v1987
          %v2055 = vunpack.c.l.b16 %v1988
          %v2056 = vunpack.c.l.b16 %v1989
          %v2057 = vunpack.c.h.b16 %v1989
          %v2058 = vunpack.c.l.b16 %v1990
          %v2059 = vunpack.c.l.b16 %v1991
          %v2060 = vunpack.c.h.b16 %v1991
          %v2061 = vunpack.c.l.b16 %v1992
          %v2062 = vunpack.c.l.b16 %v1993
          %v2063 = vunpack.c.h.b16 %v1993
          %v2064 = vunpack.c.l.b16 %v1994
          %v2065 = vunpack.c.l.b16 %v1995
          %v2066 = vunpack.c.h.b16 %v1995
          %v2067 = vunpack.c.l.b16 %v1996
          %v2068 = vunpack.c.l.b16 %v1997
          %v2069 = vunpack.c.h.b16 %v1997
          %v2070 = vunpack.c.l.b16 %v1998
          %v2071 = vunpack.c.l.b16 %v1999
          %v2072 = vunpack.c.h.b16 %v1999
          %v2073 = vunpack.c.l.b16 %v2000
          %v2074 = vunpack.c.l.b16 %v2001
          %v2075 = vunpack.c.h.b16 %v2001
          %v2076 = vunpack.c.l.b16 %v2002
          %v2077 = vunpack.c.l.b16 %v2003
          %v2078 = vunpack.c.h.b16 %v2003
          %v2079 = vunpack.c.l.b16 %v2004
          %v2080 = vunpack.c.l.b16 %v2005
          %v2081 = vunpack.c.h.b16 %v2005
          %v2082 = vunpack.c.l.b16 %v2006
          %v2083 = vunpack.c.l.b16 %v2007
          %v2084 = vunpack.c.h.b16 %v2007
          %v2085 = vunpack.c.l.b16 %v2008
          %v2086 = vunpack.c.l.b16 %v2009
          %v2087 = vunpack.c.h.b16 %v2009
          %v2088 = vunpack.c.l.b16 %v2010
          %v2089 = vunpack.c.l.b16 %v2011
          %v2090 = vunpack.c.h.b16 %v2011
          %v2091 = vunpack.c.l.b16 %v2012
          %v2092 = vunpack.c.l.b16 %v2013
          %v2093 = vunpack.c.h.b16 %v2013
          %v2094 = vunpack.c.l.b16 %v2014
          %v2095 = vpack.c.b16 %v2050, %v2047
          %v2096 = vpack.c.b16 %v2051, %v2048
          %v2097 = vpack.c.b16 %v2052, %v2049
          %v2098 = vpack.c.b16 %v2056, %v2053
          %v2099 = vpack.c.b16 %v2057, %v2054
          %v2100 = vpack.c.b16 %v2058, %v2055
          %v2101 = vpack.c.b16 %v2062, %v2059
          %v2102 = vpack.c.b16 %v2063, %v2060
          %v2103 = vpack.c.b16 %v2064, %v2061
          %v2104 = vpack.c.b16 %v2068, %v2065
          %v2105 = vpack.c.b16 %v2069, %v2066
          %v2106 = vpack.c.b16 %v2070, %v2067
          %v2107 = vpack.c.b16 %v2074, %v2071
          %v2108 = vpack.c.b16 %v2075, %v2072
          %v2109 = vpack.c.b16 %v2076, %v2073
          %v2110 = vpack.c.b16 %v2080, %v2077
          %v2111 = vpack.c.b16 %v2081, %v2078
          %v2112 = vpack.c.b16 %v2082, %v2079
          %v2113 = vpack.c.b16 %v2086, %v2083
          %v2114 = vpack.c.b16 %v2087, %v2084
          %v2115 = vpack.c.b16 %v2088, %v2085
          %v2116 = vpack.c.b16 %v2092, %v2089
          %v2117 = vpack.c.b16 %v2093, %v2090
          %v2118 = vpack.c.b16 %v2094, %v2091
          %2143 = vmatprep.subr.bf16.mxu0 %v2096
          %2144 = vmatpush1.bf16.msra.mxu0 %v2095
          %2145 = vmatprep.subr.bf16.mxu0 %v2099
          %2146 = vmatpush1.bf16.msra.mxu0 %v2098
          %2147 = vmatprep.subr.bf16.mxu0 %v2102
          %2148 = vmatpush1.bf16.msra.mxu0 %v2101
          %2149 = vmatprep.subr.bf16.mxu0 %v2105
          %2150 = vmatpush1.bf16.msra.mxu0 %v2104
          %2151 = vmatprep.subr.bf16.mxu0 %v2108
          %2152 = vmatpush1.bf16.msra.mxu0 %v2107
          %2153 = vmatprep.subr.bf16.mxu0 %v2111
          %2154 = vmatpush1.bf16.msra.mxu0 %v2110
          %2155 = vmatprep.subr.bf16.mxu0 %v2114
          %2156 = vmatpush1.bf16.msra.mxu0 %v2113
          %2157 = vmatprep.subr.bf16.mxu0 %v2117
          %2158 = vmatpush1.bf16.msra.mxu0 %v2116
          %2159 = vmatprep.subr.bf16.mxu0 0
          %2160 = vmatpush1.bf16.msra.mxu0 0
          %2161 = vmatprep.subr.bf16.mxu0 0
          %2162 = vmatpush1.bf16.msra.mxu0 0
          %2163 = vmatprep.subr.bf16.mxu0 0
          %2164 = vmatpush1.bf16.msra.mxu0 0
          %2165 = vmatprep.subr.bf16.mxu0 0
          %2166 = vmatpush1.bf16.msra.mxu0 0
          %2167 = vmatprep.subr.bf16.mxu0 0
          %2168 = vmatpush1.bf16.msra.mxu0 0
          %2169 = vmatprep.subr.bf16.mxu0 0
          %2170 = vmatpush1.bf16.msra.mxu0 0
          %2171 = vmatprep.subr.bf16.mxu0 0
          %2172 = vmatpush1.bf16.msra.mxu0 0
          %2173 = vmatprep.subr.bf16.mxu0 0
          %2174 = vmatpush1.bf16.msra.mxu0 0
          %2175 = vmatprep.mubr.bf16.mxu0 0
          %2176 = vmatmul.mubr.bf16.gmra.mrb[0].mxu0 %v1982
          %v2177 = vpop.f32.mrb[0].mxu0
          %v2178 = vadd.f32 0.0, %v2177
          %v2179 = vpop.f32.mrb[0].mxu0
          %v2180 = vadd.f32 0.0, %v2179
          %v2181 = vpop.f32.mrb[0].mxu0
          %v2182 = vpop.f32.mrb[0].mxu0
          %2183 = vdwg.mxu0
          %2184 = vmatprep.subr.bf16.mxu0 0
          %2185 = vmatpush1.bf16.msra.mxu0 %v2097
          %2186 = vmatprep.subr.bf16.mxu0 0
          %2187 = vmatpush1.bf16.msra.mxu0 %v2100
          %2188 = vmatprep.subr.bf16.mxu0 0
          %2189 = vmatpush1.bf16.msra.mxu0 %v2103
          %2190 = vmatprep.subr.bf16.mxu0 0
          %2191 = vmatpush1.bf16.msra.mxu0 %v2106
          %2192 = vmatprep.subr.bf16.mxu0 0
          %2193 = vmatpush1.bf16.msra.mxu0 %v2109
          %2194 = vmatprep.subr.bf16.mxu0 0
          %2195 = vmatpush1.bf16.msra.mxu0 %v2112
          %2196 = vmatprep.subr.bf16.mxu0 0
          %2197 = vmatpush1.bf16.msra.mxu0 %v2115
          %2198 = vmatprep.subr.bf16.mxu0 0
          %2199 = vmatpush1.bf16.msra.mxu0 %v2118
          %2200 = vmatprep.subr.bf16.mxu0 0
          %2201 = vmatpush1.bf16.msra.mxu0 0
          %2202 = vmatprep.subr.bf16.mxu0 0
          %2203 = vmatpush1.bf16.msra.mxu0 0
          %2204 = vmatprep.subr.bf16.mxu0 0
          %2205 = vmatpush1.bf16.msra.mxu0 0
          %2206 = vmatprep.subr.bf16.mxu0 0
          %2207 = vmatpush1.bf16.msra.mxu0 0
          %2208 = vmatprep.subr.bf16.mxu0 0
          %2209 = vmatpush1.bf16.msra.mxu0 0
          %2210 = vmatprep.subr.bf16.mxu0 0
          %2211 = vmatpush1.bf16.msra.mxu0 0
          %2212 = vmatprep.subr.bf16.mxu0 0
          %2213 = vmatpush1.bf16.msra.mxu0 0
          %2214 = vmatprep.subr.bf16.mxu0 0
          %2215 = vmatpush1.bf16.msra.mxu0 0
          %2216 = vmatprep.mubr.bf16.mxu0 0
          %2217 = vmatmul.mubr.bf16.gmra.mrb[0].mxu0 %v1982
          %v2218 = vpop.f32.mrb[0].mxu0
          %v2219 = vadd.f32 0.0, %v2218
          %v2220 = vpop.f32.mrb[0].mxu0
          %v2221 = vpop.f32.mrb[0].mxu0
          %v2222 = vpop.f32.mrb[0].mxu0
          %2223 = vdwg.mxu0
          %v2224 = vmul.f32 %v1877, %v1980
          %v2225 = vsel %vm1871, %v2224, 0.0
          %2226 = vadd.xlane.f32.xlu0 %v2225
          %v2227 = vpop.xlane.xlu0 %2226
          %v2228 = vlaneseq
          %v2229 = vand.u32 %v2228, 127
          %v2230 = vadd.s32 %v2229, 128
          %v2231 = vadd.s32 %v2229, 256
          %vm2232 = vcmp.eq.s32.totalorder %v2229, 0
          %vm2233 = vcmp.eq.s32.totalorder %v2230, 0
          %vm2234 = vcmp.eq.s32.totalorder %v2231, 0
          %v2235 = vsel %vm2232, %v2227, %v2178
          %v2236 = vsel %vm2233, %v2227, %v2180
          %v2237 = vsel %vm2234, %v2227, %v2219
          %v2238 = vmul.f32 %v2235, 14.285714
          %v2239 = vmul.f32 %v2236, 14.285714
          %v2240 = vmul.f32 %v2237, 14.285714
          %v2244 = vcombine.low %v2238, %v2239
          %v2246 = vunpack.c.l.s4 1983009808
          %v2247 = vunpack.c.0.s8 %v2246
          %v2248 = vlaneseq
          %v2249 = vshrl.u32 %v2248, 7
          %v2250 = vsub.s32 %v2247, %v2249
          %v2251 = vrot.slane %v2244, %v2250
          %v2253 = vunpack.c.l.s4 1983009808
          %v2254 = vunpack.c.0.s8 %v2253
          %v2255 = vlaneseq
          %v2256 = vshrl.u32 %v2255, 7
          %v2257 = vsub.s32 %v2254, %v2256
          %v2258 = vrot.slane %v2240, %v2257
          %v2259 = vcombine.low %v2251, %v2258
          %2261 = vst [vmem:[#allocation8] sm:$0x3f] %v2259
        $region88: #{adamoco_forward.1} parent=79 // pred_fallthru
          _
        %s2262 = smul.u32 32, %s39
        %p2263 = scmp.lt.s32.totalorder %s2262, 127
        %s2264 = scalar_select %p2263, %s2262, 127
        %s2265 = smul.addr %s2264, 2
        %s2266 = smul.addr %s2265, 8
        %s2267 = scalar_lea.vmem %s19, %s2266
        // Predicated region
        $region89: #{adamoco_forward.1} parent=79 // pred_check
          %p2268 = pneg %p387
        $region90: #{adamoco_forward.1} parent=79 // pred_check_branch
          %2270 = sbr.rel (%p2268) target = $region92
        $region91: #{adamoco_forward.1} parent=79 // pred_region
          %s2272 = ssub.s32 32, 32
          %2273 = vsyncadd [#allocation5], %s2272
          %s2275 = sshll.u32 [#allocation4], 4
          %s2276 = int_to_ptr.vmem [resolvable:$true] %s2275
          %2278 = dma.vmem_to_hbm [thread:$0]  %s2276, 32, %s15, [#allocation5]
        $region92: #{adamoco_forward.1} parent=79 // pred_fallthru
          _
        // Predicated region
        $region93: #{adamoco_forward.1} parent=79 // pred_check
          %p2279 = pneg %p408
        $region94: #{adamoco_forward.1} parent=79 // pred_check_branch
          %2281 = sbr.rel (%p2279) target = $region96
        $region95: #{adamoco_forward.1} parent=79 // pred_region
          %s2283 = ssub.s32 32, 32
          %2284 = vsyncadd [#allocation7], %s2283
          %s2286 = sshll.u32 [#allocation6], 4
          %s2287 = int_to_ptr.vmem [resolvable:$true] %s2286
          %2289 = dma.vmem_to_hbm [thread:$0]  %s2287, 32, %s16, [#allocation7]
        $region96: #{adamoco_forward.1} parent=79 // pred_fallthru
          _
        // Predicated region
        $region97: #{adamoco_forward.1} parent=79 // pred_check
          %p2290 = pneg %p429
        $region98: #{adamoco_forward.1} parent=79 // pred_check_branch
          %2292 = sbr.rel (%p2290) target = $region100
        $region99: #{adamoco_forward.1} parent=79 // pred_region
          %s2294 = ssub.s32 96, 96
          %2295 = vsyncadd [#allocation7], %s2294
          %s2297 = sshll.u32 [#allocation8], 4
          %s2298 = int_to_ptr.vmem [resolvable:$true] %s2297
          %2300 = dma.vmem_to_hbm [thread:$0]  %s2298, 96, %s17, [#allocation7]
        $region100: #{adamoco_forward.1} parent=79 // pred_fallthru
          _
        // Predicated region
        $region101: #{adamoco_forward.1} parent=79 // pred_check
          %p2301 = pneg %p450
        $region102: #{adamoco_forward.1} parent=79 // pred_check_branch
          %2303 = sbr.rel (%p2301) target = $region104
        $region103: #{adamoco_forward.1} parent=79 // pred_region
          %s2305 = ssub.s32 32, 32
          %2306 = vsyncadd [#allocation10], %s2305
          %s2308 = sshll.u32 [#allocation9], 4
          %s2309 = int_to_ptr.vmem [resolvable:$true] %s2308
          %2311 = dma.vmem_to_hbm [thread:$0]  %s2309, 32, %s18, [#allocation10]
        $region104: #{adamoco_forward.1} parent=79 // pred_fallthru
          _
        // Predicated region
        $region105: #{adamoco_forward.1} parent=79 // pred_check
          %p2312 = pneg %p476
        $region106: #{adamoco_forward.1} parent=79 // pred_check_branch
          %2314 = sbr.rel (%p2312) target = $region108
        $region107: #{adamoco_forward.1} parent=79 // pred_region
          %s2315 = smul.u32 32, %s39
        $region108: #{adamoco_forward.1} parent=79 // pred_fallthru
          _
        // Predicated region
        $region109: #{adamoco_forward.1} parent=79 // pred_check
          %p2316 = pneg %p497
        $region110: #{adamoco_forward.1} parent=79 // pred_check_branch
          %2318 = sbr.rel (%p2316) target = $region112
        $region111: #{adamoco_forward.1} parent=79 // pred_region
          _
        $region112: #{adamoco_forward.1} parent=79 // pred_fallthru
          _
        // Predicated region
        $region113: #{adamoco_forward.1} parent=79 // pred_check
          %p2319 = pneg %p518
        $region114: #{adamoco_forward.1} parent=79 // pred_check_branch
          %2321 = sbr.rel (%p2319) target = $region116
        $region115: #{adamoco_forward.1} parent=79 // pred_region
          _
        $region116: #{adamoco_forward.1} parent=79 // pred_fallthru
          _
        // Predicated region
        $region117: #{adamoco_forward.1} parent=79 // pred_check
          %p2322 = pneg %p539
        $region118: #{adamoco_forward.1} parent=79 // pred_check_branch
          %2324 = sbr.rel (%p2322) target = $region120
        $region119: #{adamoco_forward.1} parent=79 // pred_region
          _
        $region120: #{adamoco_forward.1} parent=79 // pred_fallthru
          _
        // Predicated region
        $region121: #{adamoco_forward.1} parent=79 // pred_check
          %p2325 = pneg %p560
        $region122: #{adamoco_forward.1} parent=79 // pred_check_branch
          %2327 = sbr.rel (%p2325) target = $region124
        $region123: #{adamoco_forward.1} parent=79 // pred_region
          _
        $region124: #{adamoco_forward.1} parent=79 // pred_fallthru
          _
        // Predicated region
        $region125: #{adamoco_forward.1} parent=79 // pred_check
          %p2328 = pneg %p581
        $region126: #{adamoco_forward.1} parent=79 // pred_check_branch
          %2330 = sbr.rel (%p2328) target = $region128
        $region127: #{adamoco_forward.1} parent=79 // pred_region
          _
        $region128: #{adamoco_forward.1} parent=79 // pred_fallthru
          _
        // Predicated region
        $region129: #{adamoco_forward.1} parent=79 // pred_check
          %p2331 = pneg %p387
        $region130: #{adamoco_forward.1} parent=79 // pred_check_branch
          %2333 = sbr.rel (%p2331) target = $region132
        $region131: #{adamoco_forward.1} parent=79 // pred_region
          %2334 = dma.done [#allocation5], 32
        $region132: #{adamoco_forward.1} parent=79 // pred_fallthru
          _
        // Predicated region
        $region133: #{adamoco_forward.1} parent=79 // pred_check
          %p2335 = pneg %p408
        $region134: #{adamoco_forward.1} parent=79 // pred_check_branch
          %2337 = sbr.rel (%p2335) target = $region136
        $region135: #{adamoco_forward.1} parent=79 // pred_region
          %2338 = dma.done [#allocation7], 32
        $region136: #{adamoco_forward.1} parent=79 // pred_fallthru
          _
        // Predicated region
        $region137: #{adamoco_forward.1} parent=79 // pred_check
          %p2339 = pneg %p429
        $region138: #{adamoco_forward.1} parent=79 // pred_check_branch
          %2341 = sbr.rel (%p2339) target = $region140
        $region139: #{adamoco_forward.1} parent=79 // pred_region
          %2342 = dma.done [#allocation7], 96
        $region140: #{adamoco_forward.1} parent=79 // pred_fallthru
          _
        // Predicated region
        $region141: #{adamoco_forward.1} parent=79 // pred_check
          %p2343 = pneg %p450
        $region142: #{adamoco_forward.1} parent=79 // pred_check_branch
          %2345 = sbr.rel (%p2343) target = $region144
        $region143: #{adamoco_forward.1} parent=79 // pred_region
          %2346 = dma.done [#allocation10], 32
        $region144: #{adamoco_forward.1} parent=79 // pred_fallthru
          _
        // Predicated region
        $region145: #{adamoco_forward.1} parent=79 // pred_check
          %p2347 = pneg %p497
        $region146: #{adamoco_forward.1} parent=79 // pred_check_branch
          %2349 = sbr.rel (%p2347) target = $region148
        $region147: #{adamoco_forward.1} parent=79 // pred_region
          _
        $region148: #{adamoco_forward.1} parent=79 // pred_fallthru
          _
        // Predicated region
        $region149: #{adamoco_forward.1} parent=79 // pred_check
          %p2350 = pneg %p518
        $region150: #{adamoco_forward.1} parent=79 // pred_check_branch
          %2352 = sbr.rel (%p2350) target = $region152
        $region151: #{adamoco_forward.1} parent=79 // pred_region
          _
        $region152: #{adamoco_forward.1} parent=79 // pred_fallthru
          _
        // Predicated region
        $region153: #{adamoco_forward.1} parent=79 // pred_check
          %p2353 = pneg %p539
        $region154: #{adamoco_forward.1} parent=79 // pred_check_branch
          %2355 = sbr.rel (%p2353) target = $region156
        $region155: #{adamoco_forward.1} parent=79 // pred_region
          _
        $region156: #{adamoco_forward.1} parent=79 // pred_fallthru
          _
        // Predicated region
        $region157: #{adamoco_forward.1} parent=79 // pred_check
          %p2356 = pneg %p560
        $region158: #{adamoco_forward.1} parent=79 // pred_check_branch
          %2358 = sbr.rel (%p2356) target = $region160
        $region159: #{adamoco_forward.1} parent=79 // pred_region
          _
        $region160: #{adamoco_forward.1} parent=79 // pred_fallthru
          _
        // Predicated region
        $region161: #{adamoco_forward.1} parent=79 // pred_check
          %p2359 = pneg %p581
        $region162: #{adamoco_forward.1} parent=79 // pred_check_branch
          %2361 = sbr.rel (%p2359) target = $region164
        $region163: #{adamoco_forward.1} parent=79 // pred_region
          _
        $region164: #{adamoco_forward.1} parent=79 // pred_fallthru
          _
      $region80: #{adamoco_forward.1} parent=5 // pred_fallthru
        _
      %p2362 = scmp.le.s32.totalorder 2, %s34
      // Predicated region
      $region165: #{adamoco_forward.1} parent=5 // pred_check
        %p2363 = pneg %p2362
      $region166: #{adamoco_forward.1} parent=5 // pred_check_branch
        %2365 = sbr.rel (%p2363) target = $region168
      $region167: #{adamoco_forward.1} parent=5 // pred_region
        %s2366 = ssub.s32 %s34, 2
        // Predicated region
        $region169: #{adamoco_forward.1} parent=167 // pred_check
          %p2367 = pneg %p482
        $region170: #{adamoco_forward.1} parent=167 // pred_check_branch
          %2369 = sbr.rel (%p2367) target = $region172
        $region171: #{adamoco_forward.1} parent=167 // pred_region
          %s2370 = smul.u32 32, %s40
          %p2371 = scmp.lt.s32.totalorder %s2370, 127
          %s2372 = scalar_select %p2371, %s2370, 127
          %s2373 = smul.addr %s2372, 2
          %s2374 = smul.addr %s2373, 8
          %s2375 = scalar_lea.vmem %s19, %s2374
        $region172: #{adamoco_forward.1} parent=167 // pred_fallthru
          _
      $region168: #{adamoco_forward.1} parent=5 // pred_fallthru
        _
    $region6: #{adamoco_forward.1} parent=1 // loop_footer
      %s38 = sadd.s32 1, %s34
    $region7: #{adamoco_forward.1} parent=1 // loop_footer_branch
      %33 = sbr.rel target = $region3
    $region8: #{adamoco_forward.1} parent=1 // loop_exit
      _
    %2376 = vsyncpa [#allocation5], 1
    %s2377 = scalar_lea.sflag [#allocation5], 1
    %2378 = vsyncpa %s2377, 1
    %2379 = vsyncpa [#allocation7], 1
    %2380 = vsyncpa [#allocation10], 1

</llo_original>
